<compile_context>
chip_gen: v7x
topology: tpu7x:2x2x1
jax: 0.10.0
libtpu: 0.0.40
codegen_flags: <defaults>
</compile_context>

<pallas_src>
import functools

import jax
import jax.numpy as jnp
from jax.experimental import pallas as pl
from jax.experimental.pallas import tpu as pltpu


# ---------------------------------------------------------------------------
# Multi-head attention core on VMEM-resident f32 tiles.
# Heads are unrolled as plain 2-D MXU matmuls (static lane slices), keeping
# the lowering to simple 2-D ops; softmax epilogue stays in f32 (VPU/EUP/XLU).
# ---------------------------------------------------------------------------
def _mha_core(q, k, v, *, num_heads, scale):
    """q: (N, C), k/v: (Nk, C) float32 -> context (N, C) float32."""
    N, C = q.shape
    d = C // num_heads
    dn = (((1,), (1,)), ((), ()))  # contract head_dim of both operands
    parts = []
    for h in range(num_heads):
        sl = slice(h * d, (h + 1) * d)
        qh, kh, vh = q[:, sl], k[:, sl], v[:, sl]
        s = jax.lax.dot_general(qh, kh, dn,
                                preferred_element_type=jnp.float32) * scale
        s = s - jnp.max(s, axis=-1, keepdims=True)
        p = jnp.exp(s)
        p = p * pl.reciprocal(jnp.sum(p, axis=-1, keepdims=True))
        parts.append(jnp.dot(p, vh, preferred_element_type=jnp.float32))
    return jnp.concatenate(parts, axis=-1)  # (N, C), head-major columns


def _attn_self_kernel(x_ref, wqkv_ref, wp_ref, bp_ref, o_ref, *,
                      num_heads, scale):
    # x_ref: (1, N, C); wqkv_ref: (C, 3C) = [Wq | Wk | Wv]; wp_ref: (C, C)
    x = x_ref[0].astype(jnp.float32)
    C = x.shape[-1]
    qkv = jnp.dot(x, wqkv_ref[...], preferred_element_type=jnp.float32)
    q = qkv[:, :C]
    k = qkv[:, C:2 * C]
    v = qkv[:, 2 * C:]
    ctx = _mha_core(q, k, v, num_heads=num_heads, scale=scale)
    out = jnp.dot(ctx, wp_ref[...], preferred_element_type=jnp.float32)
    out = out + bp_ref[...]
    o_ref[0] = out.astype(o_ref.dtype)


def _attn_cross_kernel(xq_ref, xkv_ref, wq_ref, wkv_ref, wp_ref, bp_ref,
                       o_ref, *, num_heads, scale):
    # xq_ref: (1, N, C); xkv_ref: (1, Nk, C) (spatially-reduced KV source)
    xq = xq_ref[0].astype(jnp.float32)
    xkv = xkv_ref[0].astype(jnp.float32)
    C = xq.shape[-1]
    q = jnp.dot(xq, wq_ref[...], preferred_element_type=jnp.float32)
    kv = jnp.dot(xkv, wkv_ref[...], preferred_element_type=jnp.float32)
    k = kv[:, :C]
    v = kv[:, C:]
    ctx = _mha_core(q, k, v, num_heads=num_heads, scale=scale)
    out = jnp.dot(ctx, wp_ref[...], preferred_element_type=jnp.float32)
    out = out + bp_ref[...]
    o_ref[0] = out.astype(o_ref.dtype)


def _sr_norm_kernel(p_ref, w_ref, pk_ref, o_ref):
    # p_ref: (1, Np, K) patches; w_ref: (K, C) flattened conv weight;
    # pk_ref: (3, C) = [conv_bias, ln_gamma, ln_beta]; o_ref: (1, Np, C)
    y = jnp.dot(p_ref[0].astype(jnp.float32), w_ref[...],
                preferred_element_type=jnp.float32)
    params = pk_ref[...]
    y = y + params[0:1, :]
    inv_c = 1.0 / y.shape[-1]
    s1 = jnp.sum(y, axis=-1, keepdims=True) * inv_c         # mean
    s2 = jnp.sum(y * y, axis=-1, keepdims=True) * inv_c     # E[y^2]
    var = s2 - s1 * s1
    y = (y - s1) * jax.lax.rsqrt(var + 1e-5)
    o_ref[0] = (y * params[1:2, :] + params[2:3, :]).astype(o_ref.dtype)


# ---------------------------------------------------------------------------
# Wrapper: forward pass of the PyTorch Attention module.
# ---------------------------------------------------------------------------
def pvt_attention(x, H, W, *, num_heads, q_w, kv_w, proj_w, proj_b,
                  sr_ratio=1, sr_w=None, sr_b=None, norm_g=None, norm_b=None,
                  qk_scale=None):
    """x: (B, N, C), N == H*W.  Weights use PyTorch layouts:
    Linear (out, in), Conv2d (out, in, kh, kw).  Dropout p=0 (inference)."""
    B, N, C = x.shape
    assert C % num_heads == 0
    d = C // num_heads
    scale = float(qk_scale) if qk_scale is not None else float(d) ** -0.5
    dtype = x.dtype

    wp = proj_w.T                      # (C, C)
    bp = proj_b.reshape(1, C)
    parallel = pltpu.CompilerParams(dimension_semantics=("parallel",))

    if sr_ratio == 1:
        # Single fused QKV weight -> one resident operand, one MXU matmul.
        wqkv = jnp.concatenate([q_w.T, kv_w.T], axis=1)    # (C, 3C)
        kernel = functools.partial(_attn_self_kernel,
                                   num_heads=num_heads, scale=scale)
        return pl.pallas_call(
            kernel,
            out_shape=jax.ShapeDtypeStruct((B, N, C), dtype),
            grid_spec=pltpu.PrefetchScalarGridSpec(
                num_scalar_prefetch=0,
                grid=(B,),
                in_specs=[
                    pl.BlockSpec((1, N, C), lambda b: (b, 0, 0)),
                    pl.BlockSpec((C, 3 * C), lambda b: (0, 0)),
                    pl.BlockSpec((C, C), lambda b: (0, 0)),
                    pl.BlockSpec((1, C), lambda b: (0, 0)),
                ],
                out_specs=pl.BlockSpec((1, N, C), lambda b: (b, 0, 0)),
            ),
            compiler_params=parallel,
        )(x, wqkv, wp, bp)

    # ---- sr_ratio > 1: spatial reduction (strided conv) + LayerNorm ----
    assert H * W == N and H % sr_ratio == 0 and W % sr_ratio == 0
    Hp, Wp = H // sr_ratio, W // sr_ratio
    Np = Hp * Wp
    K = C * sr_ratio * sr_ratio

    # x is already channels-last: patch reshuffle never moves the lane (C) axis.
    patches = x.reshape(B, Hp, sr_ratio, Wp, sr_ratio, C)
    patches = patches.transpose(0, 1, 3, 2, 4, 5).reshape(B, Np, K)
    # Conv weight flattened to match the (kh, kw, ci) patch ordering.
    w_sr = sr_w.transpose(2, 3, 1, 0).reshape(K, C)
    sr_params = jnp.stack([sr_b.astype(jnp.float32),
                           norm_g.astype(jnp.float32),
                           norm_b.astype(jnp.float32)], axis=0)   # (3, C)

    kv_src = pl.pallas_call(
        _sr_norm_kernel,
        out_shape=jax.ShapeDtypeStruct((B, Np, C), dtype),
        grid_spec=pltpu.PrefetchScalarGridSpec(
            num_scalar_prefetch=0,
            grid=(B,),
            in_specs=[
                pl.BlockSpec((1, Np, K), lambda b: (b, 0, 0)),
                pl.BlockSpec((K, C), lambda b: (0, 0)),
                pl.BlockSpec((3, C), lambda b: (0, 0)),
            ],
            out_specs=pl.BlockSpec((1, Np, C), lambda b: (b, 0, 0)),
        ),
        compiler_params=parallel,
    )(patches, w_sr, sr_params)

    kernel = functools.partial(_attn_cross_kernel,
                               num_heads=num_heads, scale=scale)
    return pl.pallas_call(
        kernel,
        out_shape=jax.ShapeDtypeStruct((B, N, C), dtype),
        grid_spec=pltpu.PrefetchScalarGridSpec(
            num_scalar_prefetch=0,
            grid=(B,),
            in_specs=[
                pl.BlockSpec((1, N, C), lambda b: (b, 0, 0)),
                pl.BlockSpec((1, Np, C), lambda b: (b, 0, 0)),
                pl.BlockSpec((C, C), lambda b: (0, 0)),
                pl.BlockSpec((C, 2 * C), lambda b: (0, 0)),
                pl.BlockSpec((C, C), lambda b: (0, 0)),
                pl.BlockSpec((1, C), lambda b: (0, 0)),
            ],
            out_specs=pl.BlockSpec((1, N, C), lambda b: (b, 0, 0)),
        ),
        compiler_params=parallel,
    )(x, kv_src, q_w.T, kv_w.T, wp, bp)


# ---------------------------------------------------------------------------
# Pure-JAX reference (mirrors the PyTorch module exactly).
# ---------------------------------------------------------------------------
def _reference(x, H, W, *, num_heads, q_w, kv_w, proj_w, proj_b,
               sr_ratio=1, sr_w=None, sr_b=None, norm_g=None, norm_b=None,
               qk_scale=None):
    B, N, C = x.shape
    d = C // num_heads
    scale = qk_scale if qk_scale is not None else d ** -0.5
    hi = jax.lax.Precision.HIGHEST

    q = jnp.matmul(x, q_w.T, precision=hi)
    q = q.reshape(B, N, num_heads, d).transpose(0, 2, 1, 3)
    if sr_ratio > 1:
        x_ = x.transpose(0, 2, 1).reshape(B, C, H, W)
        x_ = jax.lax.conv_general_dilated(
            x_, sr_w, window_strides=(sr_ratio, sr_ratio), padding="VALID",
            dimension_numbers=("NCHW", "OIHW", "NCHW"), precision=hi)
        x_ = x_ + sr_b[None, :, None, None]
        x_ = x_.reshape(B, C, -1).transpose(0, 2, 1)
        mean = jnp.mean(x_, axis=-1, keepdims=True)
        var = jnp.mean((x_ - mean) ** 2, axis=-1, keepdims=True)
        x_ = (x_ - mean) / jnp.sqrt(var + 1e-5)
        kv_src = x_ * norm_g + norm_b
    else:
        kv_src = x
    Nk = kv_src.shape[1]
    kv = jnp.matmul(kv_src, kv_w.T, precision=hi)
    kv = kv.reshape(B, Nk, 2, num_heads, d).transpose(2, 0, 3, 1, 4)
    k, v = kv[0], kv[1]
    attn = jnp.matmul(q, k.transpose(0, 1, 3, 2), precision=hi) * scale
    attn = jax.nn.softmax(attn, axis=-1)
    out = jnp.matmul(attn, v, precision=hi).transpose(0, 2, 1, 3).reshape(B, N, C)
    return jnp.matmul(out, proj_w.T, precision=hi) + proj_b


if __name__ == "__main__":
    # Small shapes implied by the module: dim=32, num_heads=8 (head_dim=4),
    # batch=2, H=W=4 -> seq N=16.
    B, H, W = 2, 4, 4
    N = H * W
    C = 32
    num_heads = 8
    sr = 2

    key = jax.random.PRNGKey(0)
    ks = jax.random.split(key, 9)
    x = jax.random.normal(ks[0], (B, N, C), dtype=jnp.float32)
    q_w = 0.1 * jax.random.normal(ks[1], (C, C), dtype=jnp.float32)
    kv_w = 0.1 * jax.random.normal(ks[2], (2 * C, C), dtype=jnp.float32)
    proj_w = 0.1 * jax.random.normal(ks[3], (C, C), dtype=jnp.float32)
    proj_b = 0.05 * jax.random.normal(ks[4], (C,), dtype=jnp.float32)
    sr_w = 0.05 * jax.random.normal(ks[5], (C, C, sr, sr), dtype=jnp.float32)
    sr_b = 0.05 * jax.random.normal(ks[6], (C,), dtype=jnp.float32)
    norm_g = 1.0 + 0.1 * jax.random.normal(ks[7], (C,), dtype=jnp.float32)
    norm_b = 0.1 * jax.random.normal(ks[8], (C,), dtype=jnp.float32)

    common = dict(num_heads=num_heads, q_w=q_w, kv_w=kv_w,
                  proj_w=proj_w, proj_b=proj_b)

    # Default module configuration: sr_ratio == 1 (fully fused self-attention).
    out1 = jax.block_until_ready(pvt_attention(x, H, W, sr_ratio=1, **common))
    ref1 = _reference(x, H, W, sr_ratio=1, **common)
    assert out1.shape == (B, N, C)
    assert jnp.allclose(out1, ref1, atol=2e-4, rtol=2e-4), (
        float(jnp.max(jnp.abs(out1 - ref1))))

    # sr_ratio == 2: spatial-reduction conv + LayerNorm on the KV path.
    out2 = jax.block_until_ready(
        pvt_attention(x, H, W, sr_ratio=sr, sr_w=sr_w, sr_b=sr_b,
                      norm_g=norm_g, norm_b=norm_b, **common))
    ref2 = _reference(x, H, W, sr_ratio=sr, sr_w=sr_w, sr_b=sr_b,
                      norm_g=norm_g, norm_b=norm_b, **common)
    assert out2.shape == (B, N, C)
    assert jnp.allclose(out2, ref2, atol=2e-4, rtol=2e-4), (
        float(jnp.max(jnp.abs(out2 - ref2))))

    print("KERNEL_OK")
</pallas_src>

<mosaic_0001>
module attributes {stable_mosaic.version = 11 : i64} {
  func.func @_attn_self_kernel(%arg0: i32, %arg1: memref<1x16x32xf32, #tpu.memory_space<vmem>>, %arg2: memref<32x96xf32, #tpu.memory_space<vmem>>, %arg3: memref<32x32xf32, #tpu.memory_space<vmem>>, %arg4: memref<1x32xf32, #tpu.memory_space<vmem>>, %arg5: memref<1x16x32xf32, #tpu.memory_space<vmem>>) attributes {dimension_semantics = [#tpu.dimension_semantics<parallel>], iteration_bounds = array<i64: 2>, scalar_prefetch = 0 : i64, scratch_operands = 0 : i64, tpu.core_type = #tpu.core_type<tc>, window_params = [{transform_indices = @transform_0, window_bounds = array<i64: 1, 16, 32>}, {pipeline_mode = #tpu.pipeline_mode<synchronous>, transform_indices = @transform_1, window_bounds = array<i64: 32, 96>}, {pipeline_mode = #tpu.pipeline_mode<synchronous>, transform_indices = @transform_2, window_bounds = array<i64: 32, 32>}, {pipeline_mode = #tpu.pipeline_mode<synchronous>, transform_indices = @transform_3, window_bounds = array<i64: 1, 32>}, {transform_indices = @transform_4, window_bounds = array<i64: 1, 16, 32>}]} {
    %c0 = arith.constant 0 : index
    %c0_0 = arith.constant 0 : index
    %c0_1 = arith.constant 0 : index
    %0 = vector.load %arg1[%c0, %c0_0, %c0_1] : memref<1x16x32xf32, #tpu.memory_space<vmem>>, vector<1x16x32xf32>
    %1 = vector.shape_cast %0 : vector<1x16x32xf32> to vector<16x32xf32>
    %c0_2 = arith.constant 0 : index
    %c0_3 = arith.constant 0 : index
    %2 = vector.load %arg2[%c0_2, %c0_3] : memref<32x96xf32, #tpu.memory_space<vmem>>, vector<32x96xf32>
    %cst = arith.constant dense<0.000000e+00> : vector<16x96xf32>
    %3 = tpu.matmul %1, %2, %cst {dimension_numbers = #tpu.dot_dimension_numbers<[1], [0], [0], [1], [0, 0, 1, 1], [], []>} : vector<16x32xf32>, vector<32x96xf32>, vector<16x96xf32> -> vector<16x96xf32>
    %4 = vector.extract_strided_slice %3 {offsets = [0, 0], sizes = [16, 32], strides = [1, 1]} : vector<16x96xf32> to vector<16x32xf32>
    %5 = vector.extract_strided_slice %3 {offsets = [0, 32], sizes = [16, 32], strides = [1, 1]} : vector<16x96xf32> to vector<16x32xf32>
    %6 = vector.extract_strided_slice %3 {offsets = [0, 64], sizes = [16, 32], strides = [1, 1]} : vector<16x96xf32> to vector<16x32xf32>
    %7 = vector.extract_strided_slice %4 {offsets = [0, 0], sizes = [16, 4], strides = [1, 1]} : vector<16x32xf32> to vector<16x4xf32>
    %8 = vector.extract_strided_slice %5 {offsets = [0, 0], sizes = [16, 4], strides = [1, 1]} : vector<16x32xf32> to vector<16x4xf32>
    %9 = vector.extract_strided_slice %6 {offsets = [0, 0], sizes = [16, 4], strides = [1, 1]} : vector<16x32xf32> to vector<16x4xf32>
    %cst_4 = arith.constant dense<0.000000e+00> : vector<16x16xf32>
    %10 = tpu.matmul %7, %8, %cst_4 {dimension_numbers = #tpu.dot_dimension_numbers<[1], [1], [0], [0], [0, 0, 1, 0], [], []>} : vector<16x4xf32>, vector<16x4xf32>, vector<16x16xf32> -> vector<16x16xf32>
    %cst_5 = arith.constant 5.000000e-01 : f32
    %11 = vector.broadcast %cst_5 : f32 to vector<16x16xf32>
    %12 = arith.mulf %10, %11 : vector<16x16xf32>
    %cst_6 = arith.constant dense<0xFF800000> : vector<16xf32>
    %13 = vector.multi_reduction <maximumf>, %12, %cst_6 [1] : vector<16x16xf32> to vector<16xf32>
    %14 = vector.shape_cast %13 : vector<16xf32> to vector<16x1xf32>
    %15 = vector.broadcast %14 : vector<16x1xf32> to vector<16x16xf32>
    %16 = arith.subf %12, %15 : vector<16x16xf32>
    %17 = math.exp %16 : vector<16x16xf32>
    %cst_7 = arith.constant dense<0.000000e+00> : vector<16xf32>
    %18 = vector.multi_reduction <add>, %17, %cst_7 [1] : vector<16x16xf32> to vector<16xf32>
    %19 = vector.shape_cast %18 : vector<16xf32> to vector<16x1xf32>
    %20 = tpu.reciprocal %19 : vector<16x1xf32> -> vector<16x1xf32>
    %21 = vector.broadcast %20 : vector<16x1xf32> to vector<16x16xf32>
    %22 = arith.mulf %17, %21 : vector<16x16xf32>
    %cst_8 = arith.constant dense<0.000000e+00> : vector<16x4xf32>
    %23 = tpu.matmul %22, %9, %cst_8 {dimension_numbers = #tpu.dot_dimension_numbers<[1], [0], [0], [1], [0, 0, 1, 1], [], []>} : vector<16x16xf32>, vector<16x4xf32>, vector<16x4xf32> -> vector<16x4xf32>
    %24 = vector.extract_strided_slice %4 {offsets = [0, 4], sizes = [16, 4], strides = [1, 1]} : vector<16x32xf32> to vector<16x4xf32>
    %25 = vector.extract_strided_slice %5 {offsets = [0, 4], sizes = [16, 4], strides = [1, 1]} : vector<16x32xf32> to vector<16x4xf32>
    %26 = vector.extract_strided_slice %6 {offsets = [0, 4], sizes = [16, 4], strides = [1, 1]} : vector<16x32xf32> to vector<16x4xf32>
    %cst_9 = arith.constant dense<0.000000e+00> : vector<16x16xf32>
    %27 = tpu.matmul %24, %25, %cst_9 {dimension_numbers = #tpu.dot_dimension_numbers<[1], [1], [0], [0], [0, 0, 1, 0], [], []>} : vector<16x4xf32>, vector<16x4xf32>, vector<16x16xf32> -> vector<16x16xf32>
    %cst_10 = arith.constant 5.000000e-01 : f32
    %28 = vector.broadcast %cst_10 : f32 to vector<16x16xf32>
    %29 = arith.mulf %27, %28 : vector<16x16xf32>
    %cst_11 = arith.constant dense<0xFF800000> : vector<16xf32>
    %30 = vector.multi_reduction <maximumf>, %29, %cst_11 [1] : vector<16x16xf32> to vector<16xf32>
    %31 = vector.shape_cast %30 : vector<16xf32> to vector<16x1xf32>
    %32 = vector.broadcast %31 : vector<16x1xf32> to vector<16x16xf32>
    %33 = arith.subf %29, %32 : vector<16x16xf32>
    %34 = math.exp %33 : vector<16x16xf32>
    %cst_12 = arith.constant dense<0.000000e+00> : vector<16xf32>
    %35 = vector.multi_reduction <add>, %34, %cst_12 [1] : vector<16x16xf32> to vector<16xf32>
    %36 = vector.shape_cast %35 : vector<16xf32> to vector<16x1xf32>
    %37 = tpu.reciprocal %36 : vector<16x1xf32> -> vector<16x1xf32>
    %38 = vector.broadcast %37 : vector<16x1xf32> to vector<16x16xf32>
    %39 = arith.mulf %34, %38 : vector<16x16xf32>
    %cst_13 = arith.constant dense<0.000000e+00> : vector<16x4xf32>
    %40 = tpu.matmul %39, %26, %cst_13 {dimension_numbers = #tpu.dot_dimension_numbers<[1], [0], [0], [1], [0, 0, 1, 1], [], []>} : vector<16x16xf32>, vector<16x4xf32>, vector<16x4xf32> -> vector<16x4xf32>
    %41 = vector.extract_strided_slice %4 {offsets = [0, 8], sizes = [16, 4], strides = [1, 1]} : vector<16x32xf32> to vector<16x4xf32>
    %42 = vector.extract_strided_slice %5 {offsets = [0, 8], sizes = [16, 4], strides = [1, 1]} : vector<16x32xf32> to vector<16x4xf32>
    %43 = vector.extract_strided_slice %6 {offsets = [0, 8], sizes = [16, 4], strides = [1, 1]} : vector<16x32xf32> to vector<16x4xf32>
    %cst_14 = arith.constant dense<0.000000e+00> : vector<16x16xf32>
    %44 = tpu.matmul %41, %42, %cst_14 {dimension_numbers = #tpu.dot_dimension_numbers<[1], [1], [0], [0], [0, 0, 1, 0], [], []>} : vector<16x4xf32>, vector<16x4xf32>, vector<16x16xf32> -> vector<16x16xf32>
    %cst_15 = arith.constant 5.000000e-01 : f32
    %45 = vector.broadcast %cst_15 : f32 to vector<16x16xf32>
    %46 = arith.mulf %44, %45 : vector<16x16xf32>
    %cst_16 = arith.constant dense<0xFF800000> : vector<16xf32>
    %47 = vector.multi_reduction <maximumf>, %46, %cst_16 [1] : vector<16x16xf32> to vector<16xf32>
    %48 = vector.shape_cast %47 : vector<16xf32> to vector<16x1xf32>
    %49 = vector.broadcast %48 : vector<16x1xf32> to vector<16x16xf32>
    %50 = arith.subf %46, %49 : vector<16x16xf32>
    %51 = math.exp %50 : vector<16x16xf32>
    %cst_17 = arith.constant dense<0.000000e+00> : vector<16xf32>
    %52 = vector.multi_reduction <add>, %51, %cst_17 [1] : vector<16x16xf32> to vector<16xf32>
    %53 = vector.shape_cast %52 : vector<16xf32> to vector<16x1xf32>
    %54 = tpu.reciprocal %53 : vector<16x1xf32> -> vector<16x1xf32>
    %55 = vector.broadcast %54 : vector<16x1xf32> to vector<16x16xf32>
    %56 = arith.mulf %51, %55 : vector<16x16xf32>
    %cst_18 = arith.constant dense<0.000000e+00> : vector<16x4xf32>
    %57 = tpu.matmul %56, %43, %cst_18 {dimension_numbers = #tpu.dot_dimension_numbers<[1], [0], [0], [1], [0, 0, 1, 1], [], []>} : vector<16x16xf32>, vector<16x4xf32>, vector<16x4xf32> -> vector<16x4xf32>
    %58 = vector.extract_strided_slice %4 {offsets = [0, 12], sizes = [16, 4], strides = [1, 1]} : vector<16x32xf32> to vector<16x4xf32>
    %59 = vector.extract_strided_slice %5 {offsets = [0, 12], sizes = [16, 4], strides = [1, 1]} : vector<16x32xf32> to vector<16x4xf32>
    %60 = vector.extract_strided_slice %6 {offsets = [0, 12], sizes = [16, 4], strides = [1, 1]} : vector<16x32xf32> to vector<16x4xf32>
    %cst_19 = arith.constant dense<0.000000e+00> : vector<16x16xf32>
    %61 = tpu.matmul %58, %59, %cst_19 {dimension_numbers = #tpu.dot_dimension_numbers<[1], [1], [0], [0], [0, 0, 1, 0], [], []>} : vector<16x4xf32>, vector<16x4xf32>, vector<16x16xf32> -> vector<16x16xf32>
    %cst_20 = arith.constant 5.000000e-01 : f32
    %62 = vector.broadcast %cst_20 : f32 to vector<16x16xf32>
    %63 = arith.mulf %61, %62 : vector<16x16xf32>
    %cst_21 = arith.constant dense<0xFF800000> : vector<16xf32>
    %64 = vector.multi_reduction <maximumf>, %63, %cst_21 [1] : vector<16x16xf32> to vector<16xf32>
    %65 = vector.shape_cast %64 : vector<16xf32> to vector<16x1xf32>
    %66 = vector.broadcast %65 : vector<16x1xf32> to vector<16x16xf32>
    %67 = arith.subf %63, %66 : vector<16x16xf32>
    %68 = math.exp %67 : vector<16x16xf32>
    %cst_22 = arith.constant dense<0.000000e+00> : vector<16xf32>
    %69 = vector.multi_reduction <add>, %68, %cst_22 [1] : vector<16x16xf32> to vector<16xf32>
    %70 = vector.shape_cast %69 : vector<16xf32> to vector<16x1xf32>
    %71 = tpu.reciprocal %70 : vector<16x1xf32> -> vector<16x1xf32>
    %72 = vector.broadcast %71 : vector<16x1xf32> to vector<16x16xf32>
    %73 = arith.mulf %68, %72 : vector<16x16xf32>
    %cst_23 = arith.constant dense<0.000000e+00> : vector<16x4xf32>
    %74 = tpu.matmul %73, %60, %cst_23 {dimension_numbers = #tpu.dot_dimension_numbers<[1], [0], [0], [1], [0, 0, 1, 1], [], []>} : vector<16x16xf32>, vector<16x4xf32>, vector<16x4xf32> -> vector<16x4xf32>
    %75 = vector.extract_strided_slice %4 {offsets = [0, 16], sizes = [16, 4], strides = [1, 1]} : vector<16x32xf32> to vector<16x4xf32>
    %76 = vector.extract_strided_slice %5 {offsets = [0, 16], sizes = [16, 4], strides = [1, 1]} : vector<16x32xf32> to vector<16x4xf32>
    %77 = vector.extract_strided_slice %6 {offsets = [0, 16], sizes = [16, 4], strides = [1, 1]} : vector<16x32xf32> to vector<16x4xf32>
    %cst_24 = arith.constant dense<0.000000e+00> : vector<16x16xf32>
    %78 = tpu.matmul %75, %76, %cst_24 {dimension_numbers = #tpu.dot_dimension_numbers<[1], [1], [0], [0], [0, 0, 1, 0], [], []>} : vector<16x4xf32>, vector<16x4xf32>, vector<16x16xf32> -> vector<16x16xf32>
    %cst_25 = arith.constant 5.000000e-01 : f32
    %79 = vector.broadcast %cst_25 : f32 to vector<16x16xf32>
    %80 = arith.mulf %78, %79 : vector<16x16xf32>
    %cst_26 = arith.constant dense<0xFF800000> : vector<16xf32>
    %81 = vector.multi_reduction <maximumf>, %80, %cst_26 [1] : vector<16x16xf32> to vector<16xf32>
    %82 = vector.shape_cast %81 : vector<16xf32> to vector<16x1xf32>
    %83 = vector.broadcast %82 : vector<16x1xf32> to vector<16x16xf32>
    %84 = arith.subf %80, %83 : vector<16x16xf32>
    %85 = math.exp %84 : vector<16x16xf32>
    %cst_27 = arith.constant dense<0.000000e+00> : vector<16xf32>
    %86 = vector.multi_reduction <add>, %85, %cst_27 [1] : vector<16x16xf32> to vector<16xf32>
    %87 = vector.shape_cast %86 : vector<16xf32> to vector<16x1xf32>
    %88 = tpu.reciprocal %87 : vector<16x1xf32> -> vector<16x1xf32>
    %89 = vector.broadcast %88 : vector<16x1xf32> to vector<16x16xf32>
    %90 = arith.mulf %85, %89 : vector<16x16xf32>
    %cst_28 = arith.constant dense<0.000000e+00> : vector<16x4xf32>
    %91 = tpu.matmul %90, %77, %cst_28 {dimension_numbers = #tpu.dot_dimension_numbers<[1], [0], [0], [1], [0, 0, 1, 1], [], []>} : vector<16x16xf32>, vector<16x4xf32>, vector<16x4xf32> -> vector<16x4xf32>
    %92 = vector.extract_strided_slice %4 {offsets = [0, 20], sizes = [16, 4], strides = [1, 1]} : vector<16x32xf32> to vector<16x4xf32>
    %93 = vector.extract_strided_slice %5 {offsets = [0, 20], sizes = [16, 4], strides = [1, 1]} : vector<16x32xf32> to vector<16x4xf32>
    %94 = vector.extract_strided_slice %6 {offsets = [0, 20], sizes = [16, 4], strides = [1, 1]} : vector<16x32xf32> to vector<16x4xf32>
    %cst_29 = arith.constant dense<0.000000e+00> : vector<16x16xf32>
    %95 = tpu.matmul %92, %93, %cst_29 {dimension_numbers = #tpu.dot_dimension_numbers<[1], [1], [0], [0], [0, 0, 1, 0], [], []>} : vector<16x4xf32>, vector<16x4xf32>, vector<16x16xf32> -> vector<16x16xf32>
    %cst_30 = arith.constant 5.000000e-01 : f32
    %96 = vector.broadcast %cst_30 : f32 to vector<16x16xf32>
    %97 = arith.mulf %95, %96 : vector<16x16xf32>
    %cst_31 = arith.constant dense<0xFF800000> : vector<16xf32>
    %98 = vector.multi_reduction <maximumf>, %97, %cst_31 [1] : vector<16x16xf32> to vector<16xf32>
    %99 = vector.shape_cast %98 : vector<16xf32> to vector<16x1xf32>
    %100 = vector.broadcast %99 : vector<16x1xf32> to vector<16x16xf32>
    %101 = arith.subf %97, %100 : vector<16x16xf32>
    %102 = math.exp %101 : vector<16x16xf32>
    %cst_32 = arith.constant dense<0.000000e+00> : vector<16xf32>
    %103 = vector.multi_reduction <add>, %102, %cst_32 [1] : vector<16x16xf32> to vector<16xf32>
    %104 = vector.shape_cast %103 : vector<16xf32> to vector<16x1xf32>
    %105 = tpu.reciprocal %104 : vector<16x1xf32> -> vector<16x1xf32>
    %106 = vector.broadcast %105 : vector<16x1xf32> to vector<16x16xf32>
    %107 = arith.mulf %102, %106 : vector<16x16xf32>
    %cst_33 = arith.constant dense<0.000000e+00> : vector<16x4xf32>
    %108 = tpu.matmul %107, %94, %cst_33 {dimension_numbers = #tpu.dot_dimension_numbers<[1], [0], [0], [1], [0, 0, 1, 1], [], []>} : vector<16x16xf32>, vector<16x4xf32>, vector<16x4xf32> -> vector<16x4xf32>
    %109 = vector.extract_strided_slice %4 {offsets = [0, 24], sizes = [16, 4], strides = [1, 1]} : vector<16x32xf32> to vector<16x4xf32>
    %110 = vector.extract_strided_slice %5 {offsets = [0, 24], sizes = [16, 4], strides = [1, 1]} : vector<16x32xf32> to vector<16x4xf32>
    %111 = vector.extract_strided_slice %6 {offsets = [0, 24], sizes = [16, 4], strides = [1, 1]} : vector<16x32xf32> to vector<16x4xf32>
    %cst_34 = arith.constant dense<0.000000e+00> : vector<16x16xf32>
    %112 = tpu.matmul %109, %110, %cst_34 {dimension_numbers = #tpu.dot_dimension_numbers<[1], [1], [0], [0], [0, 0, 1, 0], [], []>} : vector<16x4xf32>, vector<16x4xf32>, vector<16x16xf32> -> vector<16x16xf32>
    %cst_35 = arith.constant 5.000000e-01 : f32
    %113 = vector.broadcast %cst_35 : f32 to vector<16x16xf32>
    %114 = arith.mulf %112, %113 : vector<16x16xf32>
    %cst_36 = arith.constant dense<0xFF800000> : vector<16xf32>
    %115 = vector.multi_reduction <maximumf>, %114, %cst_36 [1] : vector<16x16xf32> to vector<16xf32>
    %116 = vector.shape_cast %115 : vector<16xf32> to vector<16x1xf32>
    %117 = vector.broadcast %116 : vector<16x1xf32> to vector<16x16xf32>
    %118 = arith.subf %114, %117 : vector<16x16xf32>
    %119 = math.exp %118 : vector<16x16xf32>
    %cst_37 = arith.constant dense<0.000000e+00> : vector<16xf32>
    %120 = vector.multi_reduction <add>, %119, %cst_37 [1] : vector<16x16xf32> to vector<16xf32>
    %121 = vector.shape_cast %120 : vector<16xf32> to vector<16x1xf32>
    %122 = tpu.reciprocal %121 : vector<16x1xf32> -> vector<16x1xf32>
    %123 = vector.broadcast %122 : vector<16x1xf32> to vector<16x16xf32>
    %124 = arith.mulf %119, %123 : vector<16x16xf32>
    %cst_38 = arith.constant dense<0.000000e+00> : vector<16x4xf32>
    %125 = tpu.matmul %124, %111, %cst_38 {dimension_numbers = #tpu.dot_dimension_numbers<[1], [0], [0], [1], [0, 0, 1, 1], [], []>} : vector<16x16xf32>, vector<16x4xf32>, vector<16x4xf32> -> vector<16x4xf32>
    %126 = vector.extract_strided_slice %4 {offsets = [0, 28], sizes = [16, 4], strides = [1, 1]} : vector<16x32xf32> to vector<16x4xf32>
    %127 = vector.extract_strided_slice %5 {offsets = [0, 28], sizes = [16, 4], strides = [1, 1]} : vector<16x32xf32> to vector<16x4xf32>
    %128 = vector.extract_strided_slice %6 {offsets = [0, 28], sizes = [16, 4], strides = [1, 1]} : vector<16x32xf32> to vector<16x4xf32>
    %cst_39 = arith.constant dense<0.000000e+00> : vector<16x16xf32>
    %129 = tpu.matmul %126, %127, %cst_39 {dimension_numbers = #tpu.dot_dimension_numbers<[1], [1], [0], [0], [0, 0, 1, 0], [], []>} : vector<16x4xf32>, vector<16x4xf32>, vector<16x16xf32> -> vector<16x16xf32>
    %cst_40 = arith.constant 5.000000e-01 : f32
    %130 = vector.broadcast %cst_40 : f32 to vector<16x16xf32>
    %131 = arith.mulf %129, %130 : vector<16x16xf32>
    %cst_41 = arith.constant dense<0xFF800000> : vector<16xf32>
    %132 = vector.multi_reduction <maximumf>, %131, %cst_41 [1] : vector<16x16xf32> to vector<16xf32>
    %133 = vector.shape_cast %132 : vector<16xf32> to vector<16x1xf32>
    %134 = vector.broadcast %133 : vector<16x1xf32> to vector<16x16xf32>
    %135 = arith.subf %131, %134 : vector<16x16xf32>
    %136 = math.exp %135 : vector<16x16xf32>
    %cst_42 = arith.constant dense<0.000000e+00> : vector<16xf32>
    %137 = vector.multi_reduction <add>, %136, %cst_42 [1] : vector<16x16xf32> to vector<16xf32>
    %138 = vector.shape_cast %137 : vector<16xf32> to vector<16x1xf32>
    %139 = tpu.reciprocal %138 : vector<16x1xf32> -> vector<16x1xf32>
    %140 = vector.broadcast %139 : vector<16x1xf32> to vector<16x16xf32>
    %141 = arith.mulf %136, %140 : vector<16x16xf32>
    %cst_43 = arith.constant dense<0.000000e+00> : vector<16x4xf32>
    %142 = tpu.matmul %141, %128, %cst_43 {dimension_numbers = #tpu.dot_dimension_numbers<[1], [0], [0], [1], [0, 0, 1, 1], [], []>} : vector<16x16xf32>, vector<16x4xf32>, vector<16x4xf32> -> vector<16x4xf32>
    %143 = tpu.concatenate %23, %40, %57, %74, %91, %108, %125, %142 in 1 : vector<16x4xf32>, vector<16x4xf32>, vector<16x4xf32>, vector<16x4xf32>, vector<16x4xf32>, vector<16x4xf32>, vector<16x4xf32>, vector<16x4xf32> -> vector<16x32xf32>
    %c0_44 = arith.constant 0 : index
    %c0_45 = arith.constant 0 : index
    %144 = vector.load %arg3[%c0_44, %c0_45] : memref<32x32xf32, #tpu.memory_space<vmem>>, vector<32x32xf32>
    %cst_46 = arith.constant dense<0.000000e+00> : vector<16x32xf32>
    %145 = tpu.matmul %143, %144, %cst_46 {dimension_numbers = #tpu.dot_dimension_numbers<[1], [0], [0], [1], [0, 0, 1, 1], [], []>} : vector<16x32xf32>, vector<32x32xf32>, vector<16x32xf32> -> vector<16x32xf32>
    %c0_47 = arith.constant 0 : index
    %c0_48 = arith.constant 0 : index
    %146 = vector.load %arg4[%c0_47, %c0_48] : memref<1x32xf32, #tpu.memory_space<vmem>>, vector<1x32xf32>
    %147 = vector.broadcast %146 : vector<1x32xf32> to vector<16x32xf32>
    %148 = arith.addf %145, %147 : vector<16x32xf32>
    %c0_49 = arith.constant 0 : index
    %c0_50 = arith.constant 0 : index
    %c0_51 = arith.constant 0 : index
    %149 = vector.load %arg5[%c0_49, %c0_50, %c0_51] : memref<1x16x32xf32, #tpu.memory_space<vmem>>, vector<1x16x32xf32>
    %150 = vector.shape_cast %149 : vector<1x16x32xf32> to vector<16x32xf32>
    %151 = vector.shape_cast %148 : vector<16x32xf32> to vector<1x16x32xf32>
    tpu.vector_store %arg5[%c0_49, %c0_50, %c0_51], %151 {strides = array<i32>} : memref<1x16x32xf32, #tpu.memory_space<vmem>>, vector<1x16x32xf32>,
    return
  }
  func.func @transform_0(%arg0: i32) -> (i32, i32, i32) {
    %c0_i32 = arith.constant 0 : i32
    %c0_i32_0 = arith.constant 0 : i32
    %c0_i32_1 = arith.constant 0 : i32
    return %arg0, %c0_i32, %c0_i32_0 : i32, i32, i32
  }
  func.func @transform_1(%arg0: i32) -> (i32, i32) {
    %c0_i32 = arith.constant 0 : i32
    %c0_i32_0 = arith.constant 0 : i32
    %c0_i32_1 = arith.constant 0 : i32
    return %c0_i32, %c0_i32_0 : i32, i32
  }
  func.func @transform_2(%arg0: i32) -> (i32, i32) {
    %c0_i32 = arith.constant 0 : i32
    %c0_i32_0 = arith.constant 0 : i32
    %c0_i32_1 = arith.constant 0 : i32
    return %c0_i32, %c0_i32_0 : i32, i32
  }
  func.func @transform_3(%arg0: i32) -> (i32, i32) {
    %c0_i32 = arith.constant 0 : i32
    %c0_i32_0 = arith.constant 0 : i32
    %c0_i32_1 = arith.constant 0 : i32
    return %c0_i32, %c0_i32_0 : i32, i32
  }
  func.func @transform_4(%arg0: i32) -> (i32, i32, i32) {
    %c0_i32 = arith.constant 0 : i32
    %c0_i32_0 = arith.constant 0 : i32
    %c0_i32_1 = arith.constant 0 : i32
    return %arg0, %c0_i32, %c0_i32_0 : i32, i32, i32
  }
}

</mosaic_0001>

<llo_original>
// kernel: tpu_custom_call.1
$region0: #{tpu_custom_call.1}
  #allocation0 [shape = 'u32[]', space=smem, size = 0x4, offset = 0x4, fixed_abs, tag = 'smem constant byte address 0x4 - core index']
  #allocation1 [shape = 'u32[144,128]{1,0:T(1,128)}', space=vmem, size = 0x12000, scoped, tag = 'internal scratch']
  %s0 = inlined_call_operand.hbm [shape: f32[2,16,32], index: 0, kind: input, shape index: {}]
  %s1 = inlined_call_operand.hbm [shape: f32[32,96], index: 1, kind: input, shape index: {}]
  %s2 = inlined_call_operand.hbm [shape: f32[32,32], index: 2, kind: input, shape index: {}]
  %s3 = inlined_call_operand.vmem [shape: f32[1,32], index: 3, kind: input, shape index: {}]
  %s4 = inlined_call_operand.hbm [shape: f32[2,16,32], index: 4, kind: output, shape index: {}]
  %s5 = sld [smem:[#allocation0]]
  $region61: #{tpu_custom_call.1} parent=0
    _
  %s7 = ssub.s32 1, %s5
  %s8 = scalar_select 0, %s7, %s5
  $region1: #{tpu_custom_call.1} parent=0
    #allocation2 [shape = 'u8[16384]{0}', space=vmem, size = 0x4000, scoped, tag = 'input window, operand 0']
    #allocation3 [shape = 's32[2]{0}', space=sflag, size = 0x8, scoped, tag = 'scoped memory for tpu_custom_call.1']
    #allocation4 [shape = 's32[2]{0}', space=sflag, size = 0x8, scoped, tag = 'scoped memory for tpu_custom_call.1']
    #allocation5 [shape = 'u8[16384]{0}', space=vmem, size = 0x4000, scoped, tag = 'input window, operand 1, single buffered']
    #allocation6 [shape = 's32[1]{0}', space=sflag, size = 0x4, scoped, tag = 'scoped memory for tpu_custom_call.1']
    #allocation7 [shape = 'u8[16384]{0}', space=vmem, size = 0x4000, scoped, tag = 'input window, operand 2, single buffered']
    #allocation8 [shape = 'u8[16384]{0}', space=vmem, size = 0x4000, scoped, tag = 'output window, operand 0']
    %9 = vsyncpa [#allocation3], 0
    %s10 = scalar_lea.sflag [#allocation3], 1
    %11 = vsyncpa %s10, 0
    %12 = vsyncpa [#allocation6], 0
    %13 = vsyncpa [#allocation4], 0
    %s14 = scalar_lea.sflag [#allocation4], 1
    %15 = vsyncpa %s14, 0
    loop: start=0, step=1, limit=4
    $region2: #{tpu_custom_call.1} parent=1 // loop_pre_header
      _
    $region3: #{tpu_custom_call.1} parent=1 // loop_header
      %s17 = sphi 0, %s21
      %p18 = scmp.ge.s32.totalorder %s17, 4
      %s27 = sphi 0, %s29
      %s30 = sphi 0, %s27
      %s31 = sphi 0, %s30
      %s47 = sphi 0, %s31
      %s51 = sphi 0, %s51
      %s53 = sphi 0, %s51
      %s54 = sphi 0, %s53
      %s68 = sphi 0, %s54
      %s72 = sphi 0, %s72
      %s74 = sphi 0, %s72
      %s75 = sphi 0, %s74
      %s89 = sphi 0, %s75
      %s93 = sphi 0, %s93
      %s95 = sphi 0, %s93
      %s96 = sphi 0, %s95
      %s110 = sphi 0, %s96
      %s116 = sphi 0, %s118
      %s119 = sphi 0, %s116
      %s120 = sphi 0, %s119
      %s136 = sphi 0, %s120
    $region4: #{tpu_custom_call.1} parent=1 // loop_header_branch
      %20 = sbr.rel (%p18) target = $region8
    $region5: #{tpu_custom_call.1} parent=1 // loop_body
      %s22 = ssub.s32 %s17, 1
      %s23 = ssub.s32 %s17, 2
      %s24 = sadd.s32 %s17, 1
      %s25 = ssub.s32 %s17, %s24
      %p26 = scmp.eq.s32.totalorder %s25, 0
      %s28 = sadd.s32 %s27, 1
      %s29 = scalar_select %p26, %s27, %s28
      %p32 = pneg %p26
      %p33 = scmp.eq.s32.totalorder %s17, 1
      %p34 = por %p32, %p33
      %p35 = scmp.ne.s32.totalorder %s27, %s30
      %p36 = scmp.eq.s32.totalorder %s17, 0
      %p37 = por %p35, %p36
      %p38 = scmp.ne.s32.totalorder %s27, %s30
      %p39 = scmp.eq.s32.totalorder %s22, 1
      %p40 = por %p38, %p39
      %p41 = scmp.ne.s32.totalorder %s30, %s31
      %p42 = scmp.eq.s32.totalorder %s22, 0
      %p43 = por %p41, %p42
      %p44 = scmp.ne.s32.totalorder %s30, %s31
      %p45 = scmp.eq.s32.totalorder %s23, 1
      %p46 = por %p44, %p45
      %p48 = scmp.ne.s32.totalorder %s31, %s47
      %p49 = scmp.eq.s32.totalorder %s23, 0
      %p50 = por %p48, %p49
      %s52 = sadd.s32 %s51, 1
      %p55 = scmp.eq.s32.totalorder %s17, 1
      %p56 = scmp.ne.s32.totalorder %s51, %s53
      %p57 = scmp.eq.s32.totalorder %s17, 0
      %p58 = por %p56, %p57
      %p59 = scmp.ne.s32.totalorder %s51, %s53
      %p60 = scmp.eq.s32.totalorder %s22, 1
      %p61 = por %p59, %p60
      %p62 = scmp.ne.s32.totalorder %s53, %s54
      %p63 = scmp.eq.s32.totalorder %s22, 0
      %p64 = por %p62, %p63
      %p65 = scmp.ne.s32.totalorder %s53, %s54
      %p66 = scmp.eq.s32.totalorder %s23, 1
      %p67 = por %p65, %p66
      %p69 = scmp.ne.s32.totalorder %s54, %s68
      %p70 = scmp.eq.s32.totalorder %s23, 0
      %p71 = por %p69, %p70
      %s73 = sadd.s32 %s72, 1
      %p76 = scmp.eq.s32.totalorder %s17, 1
      %p77 = scmp.ne.s32.totalorder %s72, %s74
      %p78 = scmp.eq.s32.totalorder %s17, 0
      %p79 = por %p77, %p78
      %p80 = scmp.ne.s32.totalorder %s72, %s74
      %p81 = scmp.eq.s32.totalorder %s22, 1
      %p82 = por %p80, %p81
      %p83 = scmp.ne.s32.totalorder %s74, %s75
      %p84 = scmp.eq.s32.totalorder %s22, 0
      %p85 = por %p83, %p84
      %p86 = scmp.ne.s32.totalorder %s74, %s75
      %p87 = scmp.eq.s32.totalorder %s23, 1
      %p88 = por %p86, %p87
      %p90 = scmp.ne.s32.totalorder %s75, %s89
      %p91 = scmp.eq.s32.totalorder %s23, 0
      %p92 = por %p90, %p91
      %s94 = sadd.s32 %s93, 1
      %p97 = scmp.eq.s32.totalorder %s17, 1
      %p98 = scmp.ne.s32.totalorder %s93, %s95
      %p99 = scmp.eq.s32.totalorder %s17, 0
      %p100 = por %p98, %p99
      %p101 = scmp.ne.s32.totalorder %s93, %s95
      %p102 = scmp.eq.s32.totalorder %s22, 1
      %p103 = por %p101, %p102
      %p104 = scmp.ne.s32.totalorder %s95, %s96
      %p105 = scmp.eq.s32.totalorder %s22, 0
      %p106 = por %p104, %p105
      %p107 = scmp.ne.s32.totalorder %s95, %s96
      %p108 = scmp.eq.s32.totalorder %s23, 1
      %p109 = por %p107, %p108
      %p111 = scmp.ne.s32.totalorder %s96, %s110
      %p112 = scmp.eq.s32.totalorder %s23, 0
      %p113 = por %p111, %p112
      %s114 = ssub.s32 %s17, %s24
      %p115 = scmp.eq.s32.totalorder %s114, 0
      %s117 = sadd.s32 %s116, 1
      %s118 = scalar_select %p115, %s116, %s117
      %p121 = pneg %p115
      %p122 = scmp.eq.s32.totalorder %s17, 1
      %p123 = por %p121, %p122
      %p124 = scmp.ne.s32.totalorder %s116, %s119
      %p125 = scmp.eq.s32.totalorder %s17, 0
      %p126 = por %p124, %p125
      %p127 = scmp.ne.s32.totalorder %s116, %s119
      %p128 = scmp.eq.s32.totalorder %s22, 1
      %p129 = por %p127, %p128
      %p130 = scmp.ne.s32.totalorder %s119, %s120
      %p131 = scmp.eq.s32.totalorder %s22, 0
      %p132 = por %p130, %p131
      %p133 = scmp.ne.s32.totalorder %s119, %s120
      %p134 = scmp.eq.s32.totalorder %s23, 1
      %p135 = por %p133, %p134
      %p137 = scmp.ne.s32.totalorder %s120, %s136
      %p138 = scmp.eq.s32.totalorder %s23, 0
      %p139 = por %p137, %p138
      %p140 = scmp.le.s32.totalorder 1, %s17
      %p141 = scmp.lt.s32.totalorder %s17, 3
      %p142 = pnand %p140, %p141
      %p143 = pneg %p142
      // Predicated region
      $region9: #{tpu_custom_call.1} parent=5 // pred_check
        _
      $region10: #{tpu_custom_call.1} parent=5 // pred_check_branch
        %145 = sbr.rel (%p142) target = $region12
      $region11: #{tpu_custom_call.1} parent=5 // pred_region
        %s146 = ssub.s32 %s17, 1
        // Predicated region
        $region13: #{tpu_custom_call.1} parent=11 // pred_check
          %p147 = pneg %p64
        $region14: #{tpu_custom_call.1} parent=11 // pred_check_branch
          %149 = sbr.rel (%p147) target = $region16
        $region15: #{tpu_custom_call.1} parent=11 // pred_region
          %s151 = ssub.s32 512, 512
          %152 = vsyncadd [#allocation6], %s151
          %s153 = sshll.u32 [#allocation5], 4
          %s154 = int_to_ptr.vmem [resolvable:$true] %s153
          %159 = dma.hbm_to_vmem [thread:$0]  %s1, 512, %s154, [#allocation6], 128, 128, 8
        $region16: #{tpu_custom_call.1} parent=11 // pred_fallthru
          _
        // Predicated region
        $region17: #{tpu_custom_call.1} parent=11 // pred_check
          %p160 = pneg %p85
        $region18: #{tpu_custom_call.1} parent=11 // pred_check_branch
          %162 = sbr.rel (%p160) target = $region20
        $region19: #{tpu_custom_call.1} parent=11 // pred_region
          %s164 = ssub.s32 512, 512
          %165 = vsyncadd [#allocation6], %s164
          %s166 = sshll.u32 [#allocation7], 4
          %s167 = int_to_ptr.vmem [resolvable:$true] %s166
          %172 = dma.hbm_to_vmem [thread:$0]  %s2, 512, %s167, [#allocation6], 128, 128, 8
        $region20: #{tpu_custom_call.1} parent=11 // pred_fallthru
          _
        // Predicated region
        $region21: #{tpu_custom_call.1} parent=11 // pred_check
          %p173 = pneg %p106
        $region22: #{tpu_custom_call.1} parent=11 // pred_check_branch
          %175 = sbr.rel (%p173) target = $region24
        $region23: #{tpu_custom_call.1} parent=11 // pred_region
          _
        $region24: #{tpu_custom_call.1} parent=11 // pred_fallthru
          _
      $region12: #{tpu_custom_call.1} parent=5 // pred_fallthru
        _
      %p176 = scmp.lt.s32.totalorder %s17, 2
      // Predicated region
      $region25: #{tpu_custom_call.1} parent=5 // pred_check
        %p177 = pneg %p176
      $region26: #{tpu_custom_call.1} parent=5 // pred_check_branch
        %179 = sbr.rel (%p177) target = $region28
      $region27: #{tpu_custom_call.1} parent=5 // pred_region
        // Predicated region
        $region29: #{tpu_custom_call.1} parent=27 // pred_check
          %p180 = pneg %p37
        $region30: #{tpu_custom_call.1} parent=27 // pred_check_branch
          %182 = sbr.rel (%p180) target = $region32
        $region31: #{tpu_custom_call.1} parent=27 // pred_region
          %s183 = sand.u32 %s27, 1
          %s184 = scalar_lea.sflag [#allocation3], %s183
          %s185 = sand.u32 %s27, 1
          %s186 = smul.addr %s185, 16
          %s187 = scalar_lea.vmem [#allocation2], %s186
          %s189 = ssub.s32 256, 256
          %190 = vsyncadd %s184, %s189
          %s191 = smul.addr %s17, 2
          %s192 = smul.addr %s191, 128
          %s193 = scalar_lea.hbm %s0, %s192
          %s194 = sshll.u32 %s187, 4
          %s195 = int_to_ptr.vmem [resolvable:$true] %s194
          %200 = dma.hbm_to_vmem [thread:$0]  %s193, 256, %s195, %s184, 128, 128, 8
        $region32: #{tpu_custom_call.1} parent=27 // pred_fallthru
          _
      $region28: #{tpu_custom_call.1} parent=5 // pred_fallthru
        _
      %p201 = scmp.le.s32.totalorder 1, %s17
      %p202 = scmp.lt.s32.totalorder %s17, 3
      %p203 = pnand %p201, %p202
      %p204 = pneg %p203
      // Predicated region
      $region33: #{tpu_custom_call.1} parent=5 // pred_check
        _
      $region34: #{tpu_custom_call.1} parent=5 // pred_check_branch
        %206 = sbr.rel (%p203) target = $region36
      $region35: #{tpu_custom_call.1} parent=5 // pred_region
        %s207 = ssub.s32 %s17, 1
        %s208 = sand.u32 %s30, 1
        %s209 = scalar_lea.sflag [#allocation3], %s208
        %s210 = sand.u32 %s30, 1
        %s211 = smul.addr %s210, 16
        %s212 = scalar_lea.vmem [#allocation2], %s211
        // Predicated region
        $region37: #{tpu_custom_call.1} parent=35 // pred_check
          %p213 = pneg %p43
        $region38: #{tpu_custom_call.1} parent=35 // pred_check_branch
          %215 = sbr.rel (%p213) target = $region40
        $region39: #{tpu_custom_call.1} parent=35 // pred_region
          %216 = dma.done %s209, 256
        $region40: #{tpu_custom_call.1} parent=35 // pred_fallthru
          _
        // Predicated region
        $region41: #{tpu_custom_call.1} parent=35 // pred_check
          %p217 = pneg %p64
        $region42: #{tpu_custom_call.1} parent=35 // pred_check_branch
          %219 = sbr.rel (%p217) target = $region44
        $region43: #{tpu_custom_call.1} parent=35 // pred_region
          %220 = dma.done [#allocation6], 512
        $region44: #{tpu_custom_call.1} parent=35 // pred_fallthru
          _
        // Predicated region
        $region45: #{tpu_custom_call.1} parent=35 // pred_check
          %p221 = pneg %p85
        $region46: #{tpu_custom_call.1} parent=35 // pred_check_branch
          %223 = sbr.rel (%p221) target = $region48
        $region47: #{tpu_custom_call.1} parent=35 // pred_region
          %224 = dma.done [#allocation6], 512
        $region48: #{tpu_custom_call.1} parent=35 // pred_fallthru
          _
        %s225 = sand.u32 %s30, 1
        %s226 = scalar_lea.sflag [#allocation3], %s225
        %s227 = sand.u32 %s30, 1
        %s228 = smul.addr %s227, 16
        %s229 = scalar_lea.vmem [#allocation2], %s228
        %p230 = pneg %p43
        %p231 = pneg %p40
        %p232 = pneg %p64
        %p233 = pneg %p61
        %p234 = pneg %p85
        %p235 = pneg %p82
        %p236 = pneg %p106
        %p237 = pneg %p103
        %p238 = pneg %p132
        %p239 = pneg %p129
        %s240 = sand.u32 %s119, 1
        %s241 = scalar_lea.sflag [#allocation4], %s240
        %s242 = sand.u32 %s119, 1
        %s243 = smul.addr %s242, 16
        %s244 = scalar_lea.vmem [#allocation8], %s243
        %v245 = vld [vmem:[%s212] sm:$0xff]
        %v246 = vld [vmem:[%s212 + $0x8] sm:$0xff]
        %v247 = vld [vmem:[#allocation5] sm:$0xff]
        %v248 = vld [vmem:[#allocation5 + $0x8] sm:$0xff]
        %v249 = vld [vmem:[#allocation5 + $0x10] sm:$0xff]
        %v250 = vld [vmem:[#allocation5 + $0x18] sm:$0xff]
        %vm251 = vcmask 261120
        %v253 = vsel %vm251, %v245, 0
        %v256 = vsel %vm251, %v246, 0
        %258 = vmatprep.subr.mxu0 0.0
        %259 = vmatpush1.msra.mxu0 %v247
        %260 = vmatprep.subr.mxu0 0.0
        %261 = vmatpush1.msra.mxu0 %v248
        %262 = vmatprep.subr.mxu0 0.0
        %263 = vmatpush1.msra.mxu0 %v249
        %264 = vmatprep.subr.mxu0 0.0
        %265 = vmatpush1.msra.mxu0 %v250
        %266 = vmatprep.subr.mxu0 0.0
        %267 = vmatpush1.msra.mxu0 0.0
        %268 = vmatprep.subr.mxu0 0.0
        %269 = vmatpush1.msra.mxu0 0.0
        %270 = vmatprep.subr.mxu0 0.0
        %271 = vmatpush1.msra.mxu0 0.0
        %272 = vmatprep.subr.mxu0 0.0
        %273 = vmatpush1.msra.mxu0 0.0
        %274 = vmatprep.subr.mxu0 0.0
        %275 = vmatpush1.msra.mxu0 0.0
        %276 = vmatprep.subr.mxu0 0.0
        %277 = vmatpush1.msra.mxu0 0.0
        %278 = vmatprep.subr.mxu0 0.0
        %279 = vmatpush1.msra.mxu0 0.0
        %280 = vmatprep.subr.mxu0 0.0
        %281 = vmatpush1.msra.mxu0 0.0
        %282 = vmatprep.subr.mxu0 0.0
        %283 = vmatpush1.msra.mxu0 0.0
        %284 = vmatprep.subr.mxu0 0.0
        %285 = vmatpush1.msra.mxu0 0.0
        %286 = vmatprep.subr.mxu0 0.0
        %287 = vmatpush1.msra.mxu0 0.0
        %288 = vmatprep.subr.mxu0 0.0
        %289 = vmatpush1.msra.mxu0 0.0
        %290 = vmatprep.subr.mxu0 0.0
        %291 = vmatpush1.msra.mxu0 0.0
        %292 = vmatprep.subr.mxu0 0.0
        %293 = vmatpush1.msra.mxu0 0.0
        %294 = vmatprep.subr.mxu0 0.0
        %295 = vmatpush1.msra.mxu0 0.0
        %296 = vmatprep.subr.mxu0 0.0
        %297 = vmatpush1.msra.mxu0 0.0
        %298 = vmatprep.subr.mxu0 0.0
        %299 = vmatpush1.msra.mxu0 0.0
        %300 = vmatprep.subr.mxu0 0.0
        %301 = vmatpush1.msra.mxu0 0.0
        %302 = vmatprep.subr.mxu0 0.0
        %303 = vmatpush1.msra.mxu0 0.0
        %304 = vmatprep.subr.mxu0 0.0
        %305 = vmatpush1.msra.mxu0 0.0
        %306 = vmatprep.subr.mxu0 0.0
        %307 = vmatpush1.msra.mxu0 0.0
        %308 = vmatprep.subr.mxu0 0.0
        %309 = vmatpush1.msra.mxu0 0.0
        %310 = vmatprep.subr.mxu0 0.0
        %311 = vmatpush1.msra.mxu0 0.0
        %312 = vmatprep.subr.mxu0 0.0
        %313 = vmatpush1.msra.mxu0 0.0
        %314 = vmatprep.subr.mxu0 0.0
        %315 = vmatpush1.msra.mxu0 0.0
        %316 = vmatprep.subr.mxu0 0.0
        %317 = vmatpush1.msra.mxu0 0.0
        %318 = vmatprep.subr.mxu0 0.0
        %319 = vmatpush1.msra.mxu0 0.0
        %320 = vmatprep.subr.mxu0 0.0
        %321 = vmatpush1.msra.mxu0 0.0
        %322 = vmatprep.mubr.f32.mxu0 0.0
        %323 = vmatmul.mubr.f32.gmra.mrb[0].mxu0 %v253
        %v324 = vpop.f32.mrb[0].mxu0
        %v325 = vadd.f32 0.0, %v324
        %v326 = vpop.f32.mrb[0].mxu0
        %327 = vmatprep.mubr.f32.mxu0 0.0
        %328 = vmatmul.mubr.f32.gmra.mrb[0].mxu0 %v256
        %v329 = vpop.f32.mrb[0].mxu0
        %v330 = vadd.f32 0.0, %v329
        %v331 = vpop.f32.mrb[0].mxu0
        %332 = vdwg.mxu0
        %335 = vrot.lane.b32.xlu0 %v325, 96
        %v336 = vpop.permute.xlu0 %335
        %337 = vrot.lane.b32.xlu0 %v330, 96
        %v338 = vpop.permute.xlu0 %337
        %vm339 = vcmask 31744
        %v340 = vsel %vm339, %v325, 0
        %v342 = vsel %vm339, %v330, 0
        %v344 = vsel %vm339, %v336, 0
        %v346 = vsel %vm339, %v338, 0
        %348 = vmatprep.subr.mxu0 0.0
        %349 = vmatpush1.xpose.msra.mxu0 %v344
        %350 = vmatprep.subr.mxu0 0.0
        %351 = vmatpush1.xpose.msra.mxu0 %v346
        %352 = vmatprep.subr.mxu0 0.0
        %353 = vmatpush1.xpose.msra.mxu0 0.0
        %354 = vmatprep.subr.mxu0 0.0
        %355 = vmatpush1.xpose.msra.mxu0 0.0
        %356 = vmatprep.subr.mxu0 0.0
        %357 = vmatpush1.xpose.msra.mxu0 0.0
        %358 = vmatprep.subr.mxu0 0.0
        %359 = vmatpush1.xpose.msra.mxu0 0.0
        %360 = vmatprep.subr.mxu0 0.0
        %361 = vmatpush1.xpose.msra.mxu0 0.0
        %362 = vmatprep.subr.mxu0 0.0
        %363 = vmatpush1.xpose.msra.mxu0 0.0
        %364 = vmatprep.subr.mxu0 0.0
        %365 = vmatpush1.xpose.msra.mxu0 0.0
        %366 = vmatprep.subr.mxu0 0.0
        %367 = vmatpush1.xpose.msra.mxu0 0.0
        %368 = vmatprep.subr.mxu0 0.0
        %369 = vmatpush1.xpose.msra.mxu0 0.0
        %370 = vmatprep.subr.mxu0 0.0
        %371 = vmatpush1.xpose.msra.mxu0 0.0
        %372 = vmatprep.subr.mxu0 0.0
        %373 = vmatpush1.xpose.msra.mxu0 0.0
        %374 = vmatprep.subr.mxu0 0.0
        %375 = vmatpush1.xpose.msra.mxu0 0.0
        %376 = vmatprep.subr.mxu0 0.0
        %377 = vmatpush1.xpose.msra.mxu0 0.0
        %378 = vmatprep.subr.mxu0 0.0
        %379 = vmatpush1.xpose.msra.mxu0 0.0
        %380 = vmatprep.subr.mxu0 0.0
        %381 = vmatpush1.xpose.msra.mxu0 0.0
        %382 = vmatprep.subr.mxu0 0.0
        %383 = vmatpush1.xpose.msra.mxu0 0.0
        %384 = vmatprep.subr.mxu0 0.0
        %385 = vmatpush1.xpose.msra.mxu0 0.0
        %386 = vmatprep.subr.mxu0 0.0
        %387 = vmatpush1.xpose.msra.mxu0 0.0
        %388 = vmatprep.subr.mxu0 0.0
        %389 = vmatpush1.xpose.msra.mxu0 0.0
        %390 = vmatprep.subr.mxu0 0.0
        %391 = vmatpush1.xpose.msra.mxu0 0.0
        %392 = vmatprep.subr.mxu0 0.0
        %393 = vmatpush1.xpose.msra.mxu0 0.0
        %394 = vmatprep.subr.mxu0 0.0
        %395 = vmatpush1.xpose.msra.mxu0 0.0
        %396 = vmatprep.subr.mxu0 0.0
        %397 = vmatpush1.xpose.msra.mxu0 0.0
        %398 = vmatprep.subr.mxu0 0.0
        %399 = vmatpush1.xpose.msra.mxu0 0.0
        %400 = vmatprep.subr.mxu0 0.0
        %401 = vmatpush1.xpose.msra.mxu0 0.0
        %402 = vmatprep.subr.mxu0 0.0
        %403 = vmatpush1.xpose.msra.mxu0 0.0
        %404 = vmatprep.subr.mxu0 0.0
        %405 = vmatpush1.xpose.msra.mxu0 0.0
        %406 = vmatprep.subr.mxu0 0.0
        %407 = vmatpush1.xpose.msra.mxu0 0.0
        %408 = vmatprep.subr.mxu0 0.0
        %409 = vmatpush1.xpose.msra.mxu0 0.0
        %410 = vmatprep.subr.mxu0 0.0
        %411 = vmatpush1.xpose.msra.mxu0 0.0
        %412 = vmatprep.mubr.f32.mxu0 0.0
        %413 = vmatmul.mubr.f32.gmra.mrb[0].mxu0 %v340
        %v414 = vpop.f32.mrb[0].mxu0
        %v415 = vadd.f32 0.0, %v414
        %v416 = vpop.f32.mrb[0].mxu0
        %417 = vmatprep.mubr.f32.mxu0 0.0
        %418 = vmatmul.mubr.f32.gmra.mrb[0].mxu0 %v342
        %v419 = vpop.f32.mrb[0].mxu0
        %v420 = vadd.f32 0.0, %v419
        %v421 = vpop.f32.mrb[0].mxu0
        %422 = vdwg.mxu0
        %v423 = vmul.f32 %v415, 0.5
        %v424 = vmul.f32 %v420, 0.5
        %vm425 = vcmask 130048
        %v426 = vsel %vm425, %v423, -inf
        %427 = vmax.xlane.f32.xlu0 %v426
        %v428 = vpop.xlane.xlu0 %427
        %v429 = vsel %vm425, %v424, -inf
        %430 = vmax.xlane.f32.xlu0 %v429
        %v431 = vpop.xlane.xlu0 %430
        %v432 = vsub.f32 %v423, %v428
        %v433 = vsub.f32 %v424, %v431
        %v434 = vmul.f32 %v432, 1.442695
        %v435 = vpow.pop %v434
        %v436 = vmul.f32 %v433, 1.442695
        %v437 = vpow.pop %v436
        %v438 = vsel %vm425, %v435, 0.0
        %439 = vadd.xlane.f32.xlu0 %v438
        %v440 = vpop.xlane.xlu0 %439
        %v441 = vsel %vm425, %v437, 0.0
        %442 = vadd.xlane.f32.xlu0 %v441
        %v443 = vpop.xlane.xlu0 %442
        %v444 = vrcp.pop %v440
        %v445 = vrcp.pop %v443
        %v446 = vmul.f32 %v435, %v444
        %v447 = vmul.f32 %v437, %v445
        %448 = vrot.lane.b32.xlu0 %v325, 64
        %v449 = vpop.permute.xlu0 %448
        %450 = vrot.lane.b32.xlu0 %v330, 64
        %v451 = vpop.permute.xlu0 %450
        %v455 = vsel %vm425, %v446, 0
        %v458 = vsel %vm425, %v447, 0
        %460 = vmatprep.subr.mxu0 0.0
        %461 = vmatpush1.msra.mxu0 %v449
        %462 = vmatprep.subr.mxu0 0.0
        %463 = vmatpush1.msra.mxu0 %v451
        %464 = vmatprep.subr.mxu0 0.0
        %465 = vmatpush1.msra.mxu0 0.0
        %466 = vmatprep.subr.mxu0 0.0
        %467 = vmatpush1.msra.mxu0 0.0
        %468 = vmatprep.subr.mxu0 0.0
        %469 = vmatpush1.msra.mxu0 0.0
        %470 = vmatprep.subr.mxu0 0.0
        %471 = vmatpush1.msra.mxu0 0.0
        %472 = vmatprep.subr.mxu0 0.0
        %473 = vmatpush1.msra.mxu0 0.0
        %474 = vmatprep.subr.mxu0 0.0
        %475 = vmatpush1.msra.mxu0 0.0
        %476 = vmatprep.subr.mxu0 0.0
        %477 = vmatpush1.msra.mxu0 0.0
        %478 = vmatprep.subr.mxu0 0.0
        %479 = vmatpush1.msra.mxu0 0.0
        %480 = vmatprep.subr.mxu0 0.0
        %481 = vmatpush1.msra.mxu0 0.0
        %482 = vmatprep.subr.mxu0 0.0
        %483 = vmatpush1.msra.mxu0 0.0
        %484 = vmatprep.subr.mxu0 0.0
        %485 = vmatpush1.msra.mxu0 0.0
        %486 = vmatprep.subr.mxu0 0.0
        %487 = vmatpush1.msra.mxu0 0.0
        %488 = vmatprep.subr.mxu0 0.0
        %489 = vmatpush1.msra.mxu0 0.0
        %490 = vmatprep.subr.mxu0 0.0
        %491 = vmatpush1.msra.mxu0 0.0
        %492 = vmatprep.subr.mxu0 0.0
        %493 = vmatpush1.msra.mxu0 0.0
        %494 = vmatprep.subr.mxu0 0.0
        %495 = vmatpush1.msra.mxu0 0.0
        %496 = vmatprep.subr.mxu0 0.0
        %497 = vmatpush1.msra.mxu0 0.0
        %498 = vmatprep.subr.mxu0 0.0
        %499 = vmatpush1.msra.mxu0 0.0
        %500 = vmatprep.subr.mxu0 0.0
        %501 = vmatpush1.msra.mxu0 0.0
        %502 = vmatprep.subr.mxu0 0.0
        %503 = vmatpush1.msra.mxu0 0.0
        %504 = vmatprep.subr.mxu0 0.0
        %505 = vmatpush1.msra.mxu0 0.0
        %506 = vmatprep.subr.mxu0 0.0
        %507 = vmatpush1.msra.mxu0 0.0
        %508 = vmatprep.subr.mxu0 0.0
        %509 = vmatpush1.msra.mxu0 0.0
        %510 = vmatprep.subr.mxu0 0.0
        %511 = vmatpush1.msra.mxu0 0.0
        %512 = vmatprep.subr.mxu0 0.0
        %513 = vmatpush1.msra.mxu0 0.0
        %514 = vmatprep.subr.mxu0 0.0
        %515 = vmatpush1.msra.mxu0 0.0
        %516 = vmatprep.subr.mxu0 0.0
        %517 = vmatpush1.msra.mxu0 0.0
        %518 = vmatprep.subr.mxu0 0.0
        %519 = vmatpush1.msra.mxu0 0.0
        %520 = vmatprep.subr.mxu0 0.0
        %521 = vmatpush1.msra.mxu0 0.0
        %522 = vmatprep.subr.mxu0 0.0
        %523 = vmatpush1.msra.mxu0 0.0
        %524 = vmatprep.mubr.f32.mxu0 0.0
        %525 = vmatmul.mubr.f32.gmra.mrb[0].mxu0 %v455
        %v526 = vpop.f32.mrb[0].mxu0
        %v527 = vadd.f32 0.0, %v526
        %v528 = vpop.f32.mrb[0].mxu0
        %529 = vmatprep.mubr.f32.mxu0 0.0
        %530 = vmatmul.mubr.f32.gmra.mrb[0].mxu0 %v458
        %v531 = vpop.f32.mrb[0].mxu0
        %v532 = vadd.f32 0.0, %v531
        %v533 = vpop.f32.mrb[0].mxu0
        %534 = vdwg.mxu0
        %535 = vrot.lane.b32.xlu0 %v325, 124
        %v536 = vpop.permute.xlu0 %535
        %537 = vrot.lane.b32.xlu0 %v330, 124
        %v538 = vpop.permute.xlu0 %537
        %539 = vrot.lane.b32.xlu0 %v325, 92
        %v540 = vpop.permute.xlu0 %539
        %541 = vrot.lane.b32.xlu0 %v330, 92
        %v542 = vpop.permute.xlu0 %541
        %v543 = vsel %vm339, %v536, 0
        %v545 = vsel %vm339, %v538, 0
        %v547 = vsel %vm339, %v540, 0
        %v549 = vsel %vm339, %v542, 0
        %551 = vmatprep.subr.mxu0 0.0
        %552 = vmatpush1.xpose.msra.mxu0 %v547
        %553 = vmatprep.subr.mxu0 0.0
        %554 = vmatpush1.xpose.msra.mxu0 %v549
        %555 = vmatprep.subr.mxu0 0.0
        %556 = vmatpush1.xpose.msra.mxu0 0.0
        %557 = vmatprep.subr.mxu0 0.0
        %558 = vmatpush1.xpose.msra.mxu0 0.0
        %559 = vmatprep.subr.mxu0 0.0
        %560 = vmatpush1.xpose.msra.mxu0 0.0
        %561 = vmatprep.subr.mxu0 0.0
        %562 = vmatpush1.xpose.msra.mxu0 0.0
        %563 = vmatprep.subr.mxu0 0.0
        %564 = vmatpush1.xpose.msra.mxu0 0.0
        %565 = vmatprep.subr.mxu0 0.0
        %566 = vmatpush1.xpose.msra.mxu0 0.0
        %567 = vmatprep.subr.mxu0 0.0
        %568 = vmatpush1.xpose.msra.mxu0 0.0
        %569 = vmatprep.subr.mxu0 0.0
        %570 = vmatpush1.xpose.msra.mxu0 0.0
        %571 = vmatprep.subr.mxu0 0.0
        %572 = vmatpush1.xpose.msra.mxu0 0.0
        %573 = vmatprep.subr.mxu0 0.0
        %574 = vmatpush1.xpose.msra.mxu0 0.0
        %575 = vmatprep.subr.mxu0 0.0
        %576 = vmatpush1.xpose.msra.mxu0 0.0
        %577 = vmatprep.subr.mxu0 0.0
        %578 = vmatpush1.xpose.msra.mxu0 0.0
        %579 = vmatprep.subr.mxu0 0.0
        %580 = vmatpush1.xpose.msra.mxu0 0.0
        %581 = vmatprep.subr.mxu0 0.0
        %582 = vmatpush1.xpose.msra.mxu0 0.0
        %583 = vmatprep.subr.mxu0 0.0
        %584 = vmatpush1.xpose.msra.mxu0 0.0
        %585 = vmatprep.subr.mxu0 0.0
        %586 = vmatpush1.xpose.msra.mxu0 0.0
        %587 = vmatprep.subr.mxu0 0.0
        %588 = vmatpush1.xpose.msra.mxu0 0.0
        %589 = vmatprep.subr.mxu0 0.0
        %590 = vmatpush1.xpose.msra.mxu0 0.0
        %591 = vmatprep.subr.mxu0 0.0
        %592 = vmatpush1.xpose.msra.mxu0 0.0
        %593 = vmatprep.subr.mxu0 0.0
        %594 = vmatpush1.xpose.msra.mxu0 0.0
        %595 = vmatprep.subr.mxu0 0.0
        %596 = vmatpush1.xpose.msra.mxu0 0.0
        %597 = vmatprep.subr.mxu0 0.0
        %598 = vmatpush1.xpose.msra.mxu0 0.0
        %599 = vmatprep.subr.mxu0 0.0
        %600 = vmatpush1.xpose.msra.mxu0 0.0
        %601 = vmatprep.subr.mxu0 0.0
        %602 = vmatpush1.xpose.msra.mxu0 0.0
        %603 = vmatprep.subr.mxu0 0.0
        %604 = vmatpush1.xpose.msra.mxu0 0.0
        %605 = vmatprep.subr.mxu0 0.0
        %606 = vmatpush1.xpose.msra.mxu0 0.0
        %607 = vmatprep.subr.mxu0 0.0
        %608 = vmatpush1.xpose.msra.mxu0 0.0
        %609 = vmatprep.subr.mxu0 0.0
        %610 = vmatpush1.xpose.msra.mxu0 0.0
        %611 = vmatprep.subr.mxu0 0.0
        %612 = vmatpush1.xpose.msra.mxu0 0.0
        %613 = vmatprep.subr.mxu0 0.0
        %614 = vmatpush1.xpose.msra.mxu0 0.0
        %615 = vmatprep.mubr.f32.mxu0 0.0
        %616 = vmatmul.mubr.f32.gmra.mrb[0].mxu0 %v543
        %v617 = vpop.f32.mrb[0].mxu0
        %v618 = vadd.f32 0.0, %v617
        %v619 = vpop.f32.mrb[0].mxu0
        %620 = vmatprep.mubr.f32.mxu0 0.0
        %621 = vmatmul.mubr.f32.gmra.mrb[0].mxu0 %v545
        %v622 = vpop.f32.mrb[0].mxu0
        %v623 = vadd.f32 0.0, %v622
        %v624 = vpop.f32.mrb[0].mxu0
        %625 = vdwg.mxu0
        %v626 = vmul.f32 %v618, 0.5
        %v627 = vmul.f32 %v623, 0.5
        %v628 = vsel %vm425, %v626, -inf
        %629 = vmax.xlane.f32.xlu0 %v628
        %v630 = vpop.xlane.xlu0 %629
        %v631 = vsel %vm425, %v627, -inf
        %632 = vmax.xlane.f32.xlu0 %v631
        %v633 = vpop.xlane.xlu0 %632
        %v634 = vsub.f32 %v626, %v630
        %v635 = vsub.f32 %v627, %v633
        %v636 = vmul.f32 %v634, 1.442695
        %v637 = vpow.pop %v636
        %v638 = vmul.f32 %v635, 1.442695
        %v639 = vpow.pop %v638
        %v640 = vsel %vm425, %v637, 0.0
        %641 = vadd.xlane.f32.xlu0 %v640
        %v642 = vpop.xlane.xlu0 %641
        %v643 = vsel %vm425, %v639, 0.0
        %644 = vadd.xlane.f32.xlu0 %v643
        %v645 = vpop.xlane.xlu0 %644
        %v646 = vrcp.pop %v642
        %v647 = vrcp.pop %v645
        %v648 = vmul.f32 %v637, %v646
        %v649 = vmul.f32 %v639, %v647
        %650 = vrot.lane.b32.xlu0 %v325, 60
        %v651 = vpop.permute.xlu0 %650
        %652 = vrot.lane.b32.xlu0 %v330, 60
        %v653 = vpop.permute.xlu0 %652
        %v657 = vsel %vm425, %v648, 0
        %v660 = vsel %vm425, %v649, 0
        %662 = vmatprep.subr.mxu0 0.0
        %663 = vmatpush1.msra.mxu0 %v651
        %664 = vmatprep.subr.mxu0 0.0
        %665 = vmatpush1.msra.mxu0 %v653
        %666 = vmatprep.subr.mxu0 0.0
        %667 = vmatpush1.msra.mxu0 0.0
        %668 = vmatprep.subr.mxu0 0.0
        %669 = vmatpush1.msra.mxu0 0.0
        %670 = vmatprep.subr.mxu0 0.0
        %671 = vmatpush1.msra.mxu0 0.0
        %672 = vmatprep.subr.mxu0 0.0
        %673 = vmatpush1.msra.mxu0 0.0
        %674 = vmatprep.subr.mxu0 0.0
        %675 = vmatpush1.msra.mxu0 0.0
        %676 = vmatprep.subr.mxu0 0.0
        %677 = vmatpush1.msra.mxu0 0.0
        %678 = vmatprep.subr.mxu0 0.0
        %679 = vmatpush1.msra.mxu0 0.0
        %680 = vmatprep.subr.mxu0 0.0
        %681 = vmatpush1.msra.mxu0 0.0
        %682 = vmatprep.subr.mxu0 0.0
        %683 = vmatpush1.msra.mxu0 0.0
        %684 = vmatprep.subr.mxu0 0.0
        %685 = vmatpush1.msra.mxu0 0.0
        %686 = vmatprep.subr.mxu0 0.0
        %687 = vmatpush1.msra.mxu0 0.0
        %688 = vmatprep.subr.mxu0 0.0
        %689 = vmatpush1.msra.mxu0 0.0
        %690 = vmatprep.subr.mxu0 0.0
        %691 = vmatpush1.msra.mxu0 0.0
        %692 = vmatprep.subr.mxu0 0.0
        %693 = vmatpush1.msra.mxu0 0.0
        %694 = vmatprep.subr.mxu0 0.0
        %695 = vmatpush1.msra.mxu0 0.0
        %696 = vmatprep.subr.mxu0 0.0
        %697 = vmatpush1.msra.mxu0 0.0
        %698 = vmatprep.subr.mxu0 0.0
        %699 = vmatpush1.msra.mxu0 0.0
        %700 = vmatprep.subr.mxu0 0.0
        %701 = vmatpush1.msra.mxu0 0.0
        %702 = vmatprep.subr.mxu0 0.0
        %703 = vmatpush1.msra.mxu0 0.0
        %704 = vmatprep.subr.mxu0 0.0
        %705 = vmatpush1.msra.mxu0 0.0
        %706 = vmatprep.subr.mxu0 0.0
        %707 = vmatpush1.msra.mxu0 0.0
        %708 = vmatprep.subr.mxu0 0.0
        %709 = vmatpush1.msra.mxu0 0.0
        %710 = vmatprep.subr.mxu0 0.0
        %711 = vmatpush1.msra.mxu0 0.0
        %712 = vmatprep.subr.mxu0 0.0
        %713 = vmatpush1.msra.mxu0 0.0
        %714 = vmatprep.subr.mxu0 0.0
        %715 = vmatpush1.msra.mxu0 0.0
        %716 = vmatprep.subr.mxu0 0.0
        %717 = vmatpush1.msra.mxu0 0.0
        %718 = vmatprep.subr.mxu0 0.0
        %719 = vmatpush1.msra.mxu0 0.0
        %720 = vmatprep.subr.mxu0 0.0
        %721 = vmatpush1.msra.mxu0 0.0
        %722 = vmatprep.subr.mxu0 0.0
        %723 = vmatpush1.msra.mxu0 0.0
        %724 = vmatprep.subr.mxu0 0.0
        %725 = vmatpush1.msra.mxu0 0.0
        %726 = vmatprep.mubr.f32.mxu0 0.0
        %727 = vmatmul.mubr.f32.gmra.mrb[0].mxu0 %v657
        %v728 = vpop.f32.mrb[0].mxu0
        %v729 = vadd.f32 0.0, %v728
        %v730 = vpop.f32.mrb[0].mxu0
        %731 = vmatprep.mubr.f32.mxu0 0.0
        %732 = vmatmul.mubr.f32.gmra.mrb[0].mxu0 %v660
        %v733 = vpop.f32.mrb[0].mxu0
        %v734 = vadd.f32 0.0, %v733
        %v735 = vpop.f32.mrb[0].mxu0
        %736 = vdwg.mxu0
        %737 = vrot.lane.b32.xlu0 %v325, 120
        %v738 = vpop.permute.xlu0 %737
        %739 = vrot.lane.b32.xlu0 %v330, 120
        %v740 = vpop.permute.xlu0 %739
        %741 = vrot.lane.b32.xlu0 %v325, 88
        %v742 = vpop.permute.xlu0 %741
        %743 = vrot.lane.b32.xlu0 %v330, 88
        %v744 = vpop.permute.xlu0 %743
        %v745 = vsel %vm339, %v738, 0
        %v747 = vsel %vm339, %v740, 0
        %v749 = vsel %vm339, %v742, 0
        %v751 = vsel %vm339, %v744, 0
        %753 = vmatprep.subr.mxu0 0.0
        %754 = vmatpush1.xpose.msra.mxu0 %v749
        %755 = vmatprep.subr.mxu0 0.0
        %756 = vmatpush1.xpose.msra.mxu0 %v751
        %757 = vmatprep.subr.mxu0 0.0
        %758 = vmatpush1.xpose.msra.mxu0 0.0
        %759 = vmatprep.subr.mxu0 0.0
        %760 = vmatpush1.xpose.msra.mxu0 0.0
        %761 = vmatprep.subr.mxu0 0.0
        %762 = vmatpush1.xpose.msra.mxu0 0.0
        %763 = vmatprep.subr.mxu0 0.0
        %764 = vmatpush1.xpose.msra.mxu0 0.0
        %765 = vmatprep.subr.mxu0 0.0
        %766 = vmatpush1.xpose.msra.mxu0 0.0
        %767 = vmatprep.subr.mxu0 0.0
        %768 = vmatpush1.xpose.msra.mxu0 0.0
        %769 = vmatprep.subr.mxu0 0.0
        %770 = vmatpush1.xpose.msra.mxu0 0.0
        %771 = vmatprep.subr.mxu0 0.0
        %772 = vmatpush1.xpose.msra.mxu0 0.0
        %773 = vmatprep.subr.mxu0 0.0
        %774 = vmatpush1.xpose.msra.mxu0 0.0
        %775 = vmatprep.subr.mxu0 0.0
        %776 = vmatpush1.xpose.msra.mxu0 0.0
        %777 = vmatprep.subr.mxu0 0.0
        %778 = vmatpush1.xpose.msra.mxu0 0.0
        %779 = vmatprep.subr.mxu0 0.0
        %780 = vmatpush1.xpose.msra.mxu0 0.0
        %781 = vmatprep.subr.mxu0 0.0
        %782 = vmatpush1.xpose.msra.mxu0 0.0
        %783 = vmatprep.subr.mxu0 0.0
        %784 = vmatpush1.xpose.msra.mxu0 0.0
        %785 = vmatprep.subr.mxu0 0.0
        %786 = vmatpush1.xpose.msra.mxu0 0.0
        %787 = vmatprep.subr.mxu0 0.0
        %788 = vmatpush1.xpose.msra.mxu0 0.0
        %789 = vmatprep.subr.mxu0 0.0
        %790 = vmatpush1.xpose.msra.mxu0 0.0
        %791 = vmatprep.subr.mxu0 0.0
        %792 = vmatpush1.xpose.msra.mxu0 0.0
        %793 = vmatprep.subr.mxu0 0.0
        %794 = vmatpush1.xpose.msra.mxu0 0.0
        %795 = vmatprep.subr.mxu0 0.0
        %796 = vmatpush1.xpose.msra.mxu0 0.0
        %797 = vmatprep.subr.mxu0 0.0
        %798 = vmatpush1.xpose.msra.mxu0 0.0
        %799 = vmatprep.subr.mxu0 0.0
        %800 = vmatpush1.xpose.msra.mxu0 0.0
        %801 = vmatprep.subr.mxu0 0.0
        %802 = vmatpush1.xpose.msra.mxu0 0.0
        %803 = vmatprep.subr.mxu0 0.0
        %804 = vmatpush1.xpose.msra.mxu0 0.0
        %805 = vmatprep.subr.mxu0 0.0
        %806 = vmatpush1.xpose.msra.mxu0 0.0
        %807 = vmatprep.subr.mxu0 0.0
        %808 = vmatpush1.xpose.msra.mxu0 0.0
        %809 = vmatprep.subr.mxu0 0.0
        %810 = vmatpush1.xpose.msra.mxu0 0.0
        %811 = vmatprep.subr.mxu0 0.0
        %812 = vmatpush1.xpose.msra.mxu0 0.0
        %813 = vmatprep.subr.mxu0 0.0
        %814 = vmatpush1.xpose.msra.mxu0 0.0
        %815 = vmatprep.subr.mxu0 0.0
        %816 = vmatpush1.xpose.msra.mxu0 0.0
        %817 = vmatprep.mubr.f32.mxu0 0.0
        %818 = vmatmul.mubr.f32.gmra.mrb[0].mxu0 %v745
        %v819 = vpop.f32.mrb[0].mxu0
        %v820 = vadd.f32 0.0, %v819
        %v821 = vpop.f32.mrb[0].mxu0
        %822 = vmatprep.mubr.f32.mxu0 0.0
        %823 = vmatmul.mubr.f32.gmra.mrb[0].mxu0 %v747
        %v824 = vpop.f32.mrb[0].mxu0
        %v825 = vadd.f32 0.0, %v824
        %v826 = vpop.f32.mrb[0].mxu0
        %827 = vdwg.mxu0
        %v828 = vmul.f32 %v820, 0.5
        %v829 = vmul.f32 %v825, 0.5
        %v830 = vsel %vm425, %v828, -inf
        %831 = vmax.xlane.f32.xlu0 %v830
        %v832 = vpop.xlane.xlu0 %831
        %v833 = vsel %vm425, %v829, -inf
        %834 = vmax.xlane.f32.xlu0 %v833
        %v835 = vpop.xlane.xlu0 %834
        %v836 = vsub.f32 %v828, %v832
        %v837 = vsub.f32 %v829, %v835
        %v838 = vmul.f32 %v836, 1.442695
        %v839 = vpow.pop %v838
        %v840 = vmul.f32 %v837, 1.442695
        %v841 = vpow.pop %v840
        %v842 = vsel %vm425, %v839, 0.0
        %843 = vadd.xlane.f32.xlu0 %v842
        %v844 = vpop.xlane.xlu0 %843
        %v845 = vsel %vm425, %v841, 0.0
        %846 = vadd.xlane.f32.xlu0 %v845
        %v847 = vpop.xlane.xlu0 %846
        %v848 = vrcp.pop %v844
        %v849 = vrcp.pop %v847
        %v850 = vmul.f32 %v839, %v848
        %v851 = vmul.f32 %v841, %v849
        %852 = vrot.lane.b32.xlu0 %v325, 56
        %v853 = vpop.permute.xlu0 %852
        %854 = vrot.lane.b32.xlu0 %v330, 56
        %v855 = vpop.permute.xlu0 %854
        %v859 = vsel %vm425, %v850, 0
        %v862 = vsel %vm425, %v851, 0
        %864 = vmatprep.subr.mxu0 0.0
        %865 = vmatpush1.msra.mxu0 %v853
        %866 = vmatprep.subr.mxu0 0.0
        %867 = vmatpush1.msra.mxu0 %v855
        %868 = vmatprep.subr.mxu0 0.0
        %869 = vmatpush1.msra.mxu0 0.0
        %870 = vmatprep.subr.mxu0 0.0
        %871 = vmatpush1.msra.mxu0 0.0
        %872 = vmatprep.subr.mxu0 0.0
        %873 = vmatpush1.msra.mxu0 0.0
        %874 = vmatprep.subr.mxu0 0.0
        %875 = vmatpush1.msra.mxu0 0.0
        %876 = vmatprep.subr.mxu0 0.0
        %877 = vmatpush1.msra.mxu0 0.0
        %878 = vmatprep.subr.mxu0 0.0
        %879 = vmatpush1.msra.mxu0 0.0
        %880 = vmatprep.subr.mxu0 0.0
        %881 = vmatpush1.msra.mxu0 0.0
        %882 = vmatprep.subr.mxu0 0.0
        %883 = vmatpush1.msra.mxu0 0.0
        %884 = vmatprep.subr.mxu0 0.0
        %885 = vmatpush1.msra.mxu0 0.0
        %886 = vmatprep.subr.mxu0 0.0
        %887 = vmatpush1.msra.mxu0 0.0
        %888 = vmatprep.subr.mxu0 0.0
        %889 = vmatpush1.msra.mxu0 0.0
        %890 = vmatprep.subr.mxu0 0.0
        %891 = vmatpush1.msra.mxu0 0.0
        %892 = vmatprep.subr.mxu0 0.0
        %893 = vmatpush1.msra.mxu0 0.0
        %894 = vmatprep.subr.mxu0 0.0
        %895 = vmatpush1.msra.mxu0 0.0
        %896 = vmatprep.subr.mxu0 0.0
        %897 = vmatpush1.msra.mxu0 0.0
        %898 = vmatprep.subr.mxu0 0.0
        %899 = vmatpush1.msra.mxu0 0.0
        %900 = vmatprep.subr.mxu0 0.0
        %901 = vmatpush1.msra.mxu0 0.0
        %902 = vmatprep.subr.mxu0 0.0
        %903 = vmatpush1.msra.mxu0 0.0
        %904 = vmatprep.subr.mxu0 0.0
        %905 = vmatpush1.msra.mxu0 0.0
        %906 = vmatprep.subr.mxu0 0.0
        %907 = vmatpush1.msra.mxu0 0.0
        %908 = vmatprep.subr.mxu0 0.0
        %909 = vmatpush1.msra.mxu0 0.0
        %910 = vmatprep.subr.mxu0 0.0
        %911 = vmatpush1.msra.mxu0 0.0
        %912 = vmatprep.subr.mxu0 0.0
        %913 = vmatpush1.msra.mxu0 0.0
        %914 = vmatprep.subr.mxu0 0.0
        %915 = vmatpush1.msra.mxu0 0.0
        %916 = vmatprep.subr.mxu0 0.0
        %917 = vmatpush1.msra.mxu0 0.0
        %918 = vmatprep.subr.mxu0 0.0
        %919 = vmatpush1.msra.mxu0 0.0
        %920 = vmatprep.subr.mxu0 0.0
        %921 = vmatpush1.msra.mxu0 0.0
        %922 = vmatprep.subr.mxu0 0.0
        %923 = vmatpush1.msra.mxu0 0.0
        %924 = vmatprep.subr.mxu0 0.0
        %925 = vmatpush1.msra.mxu0 0.0
        %926 = vmatprep.subr.mxu0 0.0
        %927 = vmatpush1.msra.mxu0 0.0
        %928 = vmatprep.mubr.f32.mxu0 0.0
        %929 = vmatmul.mubr.f32.gmra.mrb[0].mxu0 %v859
        %v930 = vpop.f32.mrb[0].mxu0
        %v931 = vadd.f32 0.0, %v930
        %v932 = vpop.f32.mrb[0].mxu0
        %933 = vmatprep.mubr.f32.mxu0 0.0
        %934 = vmatmul.mubr.f32.gmra.mrb[0].mxu0 %v862
        %v935 = vpop.f32.mrb[0].mxu0
        %v936 = vadd.f32 0.0, %v935
        %v937 = vpop.f32.mrb[0].mxu0
        %938 = vdwg.mxu0
        %939 = vrot.lane.b32.xlu0 %v325, 116
        %v940 = vpop.permute.xlu0 %939
        %941 = vrot.lane.b32.xlu0 %v330, 116
        %v942 = vpop.permute.xlu0 %941
        %943 = vrot.lane.b32.xlu0 %v325, 84
        %v944 = vpop.permute.xlu0 %943
        %945 = vrot.lane.b32.xlu0 %v330, 84
        %v946 = vpop.permute.xlu0 %945
        %v947 = vsel %vm339, %v940, 0
        %v949 = vsel %vm339, %v942, 0
        %v951 = vsel %vm339, %v944, 0
        %v953 = vsel %vm339, %v946, 0
        %955 = vmatprep.subr.mxu0 0.0
        %956 = vmatpush1.xpose.msra.mxu0 %v951
        %957 = vmatprep.subr.mxu0 0.0
        %958 = vmatpush1.xpose.msra.mxu0 %v953
        %959 = vmatprep.subr.mxu0 0.0
        %960 = vmatpush1.xpose.msra.mxu0 0.0
        %961 = vmatprep.subr.mxu0 0.0
        %962 = vmatpush1.xpose.msra.mxu0 0.0
        %963 = vmatprep.subr.mxu0 0.0
        %964 = vmatpush1.xpose.msra.mxu0 0.0
        %965 = vmatprep.subr.mxu0 0.0
        %966 = vmatpush1.xpose.msra.mxu0 0.0
        %967 = vmatprep.subr.mxu0 0.0
        %968 = vmatpush1.xpose.msra.mxu0 0.0
        %969 = vmatprep.subr.mxu0 0.0
        %970 = vmatpush1.xpose.msra.mxu0 0.0
        %971 = vmatprep.subr.mxu0 0.0
        %972 = vmatpush1.xpose.msra.mxu0 0.0
        %973 = vmatprep.subr.mxu0 0.0
        %974 = vmatpush1.xpose.msra.mxu0 0.0
        %975 = vmatprep.subr.mxu0 0.0
        %976 = vmatpush1.xpose.msra.mxu0 0.0
        %977 = vmatprep.subr.mxu0 0.0
        %978 = vmatpush1.xpose.msra.mxu0 0.0
        %979 = vmatprep.subr.mxu0 0.0
        %980 = vmatpush1.xpose.msra.mxu0 0.0
        %981 = vmatprep.subr.mxu0 0.0
        %982 = vmatpush1.xpose.msra.mxu0 0.0
        %983 = vmatprep.subr.mxu0 0.0
        %984 = vmatpush1.xpose.msra.mxu0 0.0
        %985 = vmatprep.subr.mxu0 0.0
        %986 = vmatpush1.xpose.msra.mxu0 0.0
        %987 = vmatprep.subr.mxu0 0.0
        %988 = vmatpush1.xpose.msra.mxu0 0.0
        %989 = vmatprep.subr.mxu0 0.0
        %990 = vmatpush1.xpose.msra.mxu0 0.0
        %991 = vmatprep.subr.mxu0 0.0
        %992 = vmatpush1.xpose.msra.mxu0 0.0
        %993 = vmatprep.subr.mxu0 0.0
        %994 = vmatpush1.xpose.msra.mxu0 0.0
        %995 = vmatprep.subr.mxu0 0.0
        %996 = vmatpush1.xpose.msra.mxu0 0.0
        %997 = vmatprep.subr.mxu0 0.0
        %998 = vmatpush1.xpose.msra.mxu0 0.0
        %999 = vmatprep.subr.mxu0 0.0
        %1000 = vmatpush1.xpose.msra.mxu0 0.0
        %1001 = vmatprep.subr.mxu0 0.0
        %1002 = vmatpush1.xpose.msra.mxu0 0.0
        %1003 = vmatprep.subr.mxu0 0.0
        %1004 = vmatpush1.xpose.msra.mxu0 0.0
        %1005 = vmatprep.subr.mxu0 0.0
        %1006 = vmatpush1.xpose.msra.mxu0 0.0
        %1007 = vmatprep.subr.mxu0 0.0
        %1008 = vmatpush1.xpose.msra.mxu0 0.0
        %1009 = vmatprep.subr.mxu0 0.0
        %1010 = vmatpush1.xpose.msra.mxu0 0.0
        %1011 = vmatprep.subr.mxu0 0.0
        %1012 = vmatpush1.xpose.msra.mxu0 0.0
        %1013 = vmatprep.subr.mxu0 0.0
        %1014 = vmatpush1.xpose.msra.mxu0 0.0
        %1015 = vmatprep.subr.mxu0 0.0
        %1016 = vmatpush1.xpose.msra.mxu0 0.0
        %1017 = vmatprep.subr.mxu0 0.0
        %1018 = vmatpush1.xpose.msra.mxu0 0.0
        %1019 = vmatprep.mubr.f32.mxu0 0.0
        %1020 = vmatmul.mubr.f32.gmra.mrb[0].mxu0 %v947
        %v1021 = vpop.f32.mrb[0].mxu0
        %v1022 = vadd.f32 0.0, %v1021
        %v1023 = vpop.f32.mrb[0].mxu0
        %1024 = vmatprep.mubr.f32.mxu0 0.0
        %1025 = vmatmul.mubr.f32.gmra.mrb[0].mxu0 %v949
        %v1026 = vpop.f32.mrb[0].mxu0
        %v1027 = vadd.f32 0.0, %v1026
        %v1028 = vpop.f32.mrb[0].mxu0
        %1029 = vdwg.mxu0
        %v1030 = vmul.f32 %v1022, 0.5
        %v1031 = vmul.f32 %v1027, 0.5
        %v1032 = vsel %vm425, %v1030, -inf
        %1033 = vmax.xlane.f32.xlu0 %v1032
        %v1034 = vpop.xlane.xlu0 %1033
        %v1035 = vsel %vm425, %v1031, -inf
        %1036 = vmax.xlane.f32.xlu0 %v1035
        %v1037 = vpop.xlane.xlu0 %1036
        %v1038 = vsub.f32 %v1030, %v1034
        %v1039 = vsub.f32 %v1031, %v1037
        %v1040 = vmul.f32 %v1038, 1.442695
        %v1041 = vpow.pop %v1040
        %v1042 = vmul.f32 %v1039, 1.442695
        %v1043 = vpow.pop %v1042
        %v1044 = vsel %vm425, %v1041, 0.0
        %1045 = vadd.xlane.f32.xlu0 %v1044
        %v1046 = vpop.xlane.xlu0 %1045
        %v1047 = vsel %vm425, %v1043, 0.0
        %1048 = vadd.xlane.f32.xlu0 %v1047
        %v1049 = vpop.xlane.xlu0 %1048
        %v1050 = vrcp.pop %v1046
        %v1051 = vrcp.pop %v1049
        %v1052 = vmul.f32 %v1041, %v1050
        %v1053 = vmul.f32 %v1043, %v1051
        %1054 = vrot.lane.b32.xlu0 %v325, 52
        %v1055 = vpop.permute.xlu0 %1054
        %1056 = vrot.lane.b32.xlu0 %v330, 52
        %v1057 = vpop.permute.xlu0 %1056
        %v1061 = vsel %vm425, %v1052, 0
        %v1064 = vsel %vm425, %v1053, 0
        %1066 = vmatprep.subr.mxu0 0.0
        %1067 = vmatpush1.msra.mxu0 %v1055
        %1068 = vmatprep.subr.mxu0 0.0
        %1069 = vmatpush1.msra.mxu0 %v1057
        %1070 = vmatprep.subr.mxu0 0.0
        %1071 = vmatpush1.msra.mxu0 0.0
        %1072 = vmatprep.subr.mxu0 0.0
        %1073 = vmatpush1.msra.mxu0 0.0
        %1074 = vmatprep.subr.mxu0 0.0
        %1075 = vmatpush1.msra.mxu0 0.0
        %1076 = vmatprep.subr.mxu0 0.0
        %1077 = vmatpush1.msra.mxu0 0.0
        %1078 = vmatprep.subr.mxu0 0.0
        %1079 = vmatpush1.msra.mxu0 0.0
        %1080 = vmatprep.subr.mxu0 0.0
        %1081 = vmatpush1.msra.mxu0 0.0
        %1082 = vmatprep.subr.mxu0 0.0
        %1083 = vmatpush1.msra.mxu0 0.0
        %1084 = vmatprep.subr.mxu0 0.0
        %1085 = vmatpush1.msra.mxu0 0.0
        %1086 = vmatprep.subr.mxu0 0.0
        %1087 = vmatpush1.msra.mxu0 0.0
        %1088 = vmatprep.subr.mxu0 0.0
        %1089 = vmatpush1.msra.mxu0 0.0
        %1090 = vmatprep.subr.mxu0 0.0
        %1091 = vmatpush1.msra.mxu0 0.0
        %1092 = vmatprep.subr.mxu0 0.0
        %1093 = vmatpush1.msra.mxu0 0.0
        %1094 = vmatprep.subr.mxu0 0.0
        %1095 = vmatpush1.msra.mxu0 0.0
        %1096 = vmatprep.subr.mxu0 0.0
        %1097 = vmatpush1.msra.mxu0 0.0
        %1098 = vmatprep.subr.mxu0 0.0
        %1099 = vmatpush1.msra.mxu0 0.0
        %1100 = vmatprep.subr.mxu0 0.0
        %1101 = vmatpush1.msra.mxu0 0.0
        %1102 = vmatprep.subr.mxu0 0.0
        %1103 = vmatpush1.msra.mxu0 0.0
        %1104 = vmatprep.subr.mxu0 0.0
        %1105 = vmatpush1.msra.mxu0 0.0
        %1106 = vmatprep.subr.mxu0 0.0
        %1107 = vmatpush1.msra.mxu0 0.0
        %1108 = vmatprep.subr.mxu0 0.0
        %1109 = vmatpush1.msra.mxu0 0.0
        %1110 = vmatprep.subr.mxu0 0.0
        %1111 = vmatpush1.msra.mxu0 0.0
        %1112 = vmatprep.subr.mxu0 0.0
        %1113 = vmatpush1.msra.mxu0 0.0
        %1114 = vmatprep.subr.mxu0 0.0
        %1115 = vmatpush1.msra.mxu0 0.0
        %1116 = vmatprep.subr.mxu0 0.0
        %1117 = vmatpush1.msra.mxu0 0.0
        %1118 = vmatprep.subr.mxu0 0.0
        %1119 = vmatpush1.msra.mxu0 0.0
        %1120 = vmatprep.subr.mxu0 0.0
        %1121 = vmatpush1.msra.mxu0 0.0
        %1122 = vmatprep.subr.mxu0 0.0
        %1123 = vmatpush1.msra.mxu0 0.0
        %1124 = vmatprep.subr.mxu0 0.0
        %1125 = vmatpush1.msra.mxu0 0.0
        %1126 = vmatprep.subr.mxu0 0.0
        %1127 = vmatpush1.msra.mxu0 0.0
        %1128 = vmatprep.subr.mxu0 0.0
        %1129 = vmatpush1.msra.mxu0 0.0
        %1130 = vmatprep.mubr.f32.mxu0 0.0
        %1131 = vmatmul.mubr.f32.gmra.mrb[0].mxu0 %v1061
        %v1132 = vpop.f32.mrb[0].mxu0
        %v1133 = vadd.f32 0.0, %v1132
        %v1134 = vpop.f32.mrb[0].mxu0
        %1135 = vmatprep.mubr.f32.mxu0 0.0
        %1136 = vmatmul.mubr.f32.gmra.mrb[0].mxu0 %v1064
        %v1137 = vpop.f32.mrb[0].mxu0
        %v1138 = vadd.f32 0.0, %v1137
        %v1139 = vpop.f32.mrb[0].mxu0
        %1140 = vdwg.mxu0
        %1141 = vrot.lane.b32.xlu0 %v325, 112
        %v1142 = vpop.permute.xlu0 %1141
        %1143 = vrot.lane.b32.xlu0 %v330, 112
        %v1144 = vpop.permute.xlu0 %1143
        %1145 = vrot.lane.b32.xlu0 %v325, 80
        %v1146 = vpop.permute.xlu0 %1145
        %1147 = vrot.lane.b32.xlu0 %v330, 80
        %v1148 = vpop.permute.xlu0 %1147
        %v1149 = vsel %vm339, %v1142, 0
        %v1151 = vsel %vm339, %v1144, 0
        %v1153 = vsel %vm339, %v1146, 0
        %v1155 = vsel %vm339, %v1148, 0
        %1157 = vmatprep.subr.mxu0 0.0
        %1158 = vmatpush1.xpose.msra.mxu0 %v1153
        %1159 = vmatprep.subr.mxu0 0.0
        %1160 = vmatpush1.xpose.msra.mxu0 %v1155
        %1161 = vmatprep.subr.mxu0 0.0
        %1162 = vmatpush1.xpose.msra.mxu0 0.0
        %1163 = vmatprep.subr.mxu0 0.0
        %1164 = vmatpush1.xpose.msra.mxu0 0.0
        %1165 = vmatprep.subr.mxu0 0.0
        %1166 = vmatpush1.xpose.msra.mxu0 0.0
        %1167 = vmatprep.subr.mxu0 0.0
        %1168 = vmatpush1.xpose.msra.mxu0 0.0
        %1169 = vmatprep.subr.mxu0 0.0
        %1170 = vmatpush1.xpose.msra.mxu0 0.0
        %1171 = vmatprep.subr.mxu0 0.0
        %1172 = vmatpush1.xpose.msra.mxu0 0.0
        %1173 = vmatprep.subr.mxu0 0.0
        %1174 = vmatpush1.xpose.msra.mxu0 0.0
        %1175 = vmatprep.subr.mxu0 0.0
        %1176 = vmatpush1.xpose.msra.mxu0 0.0
        %1177 = vmatprep.subr.mxu0 0.0
        %1178 = vmatpush1.xpose.msra.mxu0 0.0
        %1179 = vmatprep.subr.mxu0 0.0
        %1180 = vmatpush1.xpose.msra.mxu0 0.0
        %1181 = vmatprep.subr.mxu0 0.0
        %1182 = vmatpush1.xpose.msra.mxu0 0.0
        %1183 = vmatprep.subr.mxu0 0.0
        %1184 = vmatpush1.xpose.msra.mxu0 0.0
        %1185 = vmatprep.subr.mxu0 0.0
        %1186 = vmatpush1.xpose.msra.mxu0 0.0
        %1187 = vmatprep.subr.mxu0 0.0
        %1188 = vmatpush1.xpose.msra.mxu0 0.0
        %1189 = vmatprep.subr.mxu0 0.0
        %1190 = vmatpush1.xpose.msra.mxu0 0.0
        %1191 = vmatprep.subr.mxu0 0.0
        %1192 = vmatpush1.xpose.msra.mxu0 0.0
        %1193 = vmatprep.subr.mxu0 0.0
        %1194 = vmatpush1.xpose.msra.mxu0 0.0
        %1195 = vmatprep.subr.mxu0 0.0
        %1196 = vmatpush1.xpose.msra.mxu0 0.0
        %1197 = vmatprep.subr.mxu0 0.0
        %1198 = vmatpush1.xpose.msra.mxu0 0.0
        %1199 = vmatprep.subr.mxu0 0.0
        %1200 = vmatpush1.xpose.msra.mxu0 0.0
        %1201 = vmatprep.subr.mxu0 0.0
        %1202 = vmatpush1.xpose.msra.mxu0 0.0
        %1203 = vmatprep.subr.mxu0 0.0
        %1204 = vmatpush1.xpose.msra.mxu0 0.0
        %1205 = vmatprep.subr.mxu0 0.0
        %1206 = vmatpush1.xpose.msra.mxu0 0.0
        %1207 = vmatprep.subr.mxu0 0.0
        %1208 = vmatpush1.xpose.msra.mxu0 0.0
        %1209 = vmatprep.subr.mxu0 0.0
        %1210 = vmatpush1.xpose.msra.mxu0 0.0
        %1211 = vmatprep.subr.mxu0 0.0
        %1212 = vmatpush1.xpose.msra.mxu0 0.0
        %1213 = vmatprep.subr.mxu0 0.0
        %1214 = vmatpush1.xpose.msra.mxu0 0.0
        %1215 = vmatprep.subr.mxu0 0.0
        %1216 = vmatpush1.xpose.msra.mxu0 0.0
        %1217 = vmatprep.subr.mxu0 0.0
        %1218 = vmatpush1.xpose.msra.mxu0 0.0
        %1219 = vmatprep.subr.mxu0 0.0
        %1220 = vmatpush1.xpose.msra.mxu0 0.0
        %1221 = vmatprep.mubr.f32.mxu0 0.0
        %1222 = vmatmul.mubr.f32.gmra.mrb[0].mxu0 %v1149
        %v1223 = vpop.f32.mrb[0].mxu0
        %v1224 = vadd.f32 0.0, %v1223
        %v1225 = vpop.f32.mrb[0].mxu0
        %1226 = vmatprep.mubr.f32.mxu0 0.0
        %1227 = vmatmul.mubr.f32.gmra.mrb[0].mxu0 %v1151
        %v1228 = vpop.f32.mrb[0].mxu0
        %v1229 = vadd.f32 0.0, %v1228
        %v1230 = vpop.f32.mrb[0].mxu0
        %1231 = vdwg.mxu0
        %v1232 = vmul.f32 %v1224, 0.5
        %v1233 = vmul.f32 %v1229, 0.5
        %v1234 = vsel %vm425, %v1232, -inf
        %1235 = vmax.xlane.f32.xlu0 %v1234
        %v1236 = vpop.xlane.xlu0 %1235
        %v1237 = vsel %vm425, %v1233, -inf
        %1238 = vmax.xlane.f32.xlu0 %v1237
        %v1239 = vpop.xlane.xlu0 %1238
        %v1240 = vsub.f32 %v1232, %v1236
        %v1241 = vsub.f32 %v1233, %v1239
        %v1242 = vmul.f32 %v1240, 1.442695
        %v1243 = vpow.pop %v1242
        %v1244 = vmul.f32 %v1241, 1.442695
        %v1245 = vpow.pop %v1244
        %v1246 = vsel %vm425, %v1243, 0.0
        %1247 = vadd.xlane.f32.xlu0 %v1246
        %v1248 = vpop.xlane.xlu0 %1247
        %v1249 = vsel %vm425, %v1245, 0.0
        %1250 = vadd.xlane.f32.xlu0 %v1249
        %v1251 = vpop.xlane.xlu0 %1250
        %v1252 = vrcp.pop %v1248
        %v1253 = vrcp.pop %v1251
        %v1254 = vmul.f32 %v1243, %v1252
        %v1255 = vmul.f32 %v1245, %v1253
        %1256 = vrot.lane.b32.xlu0 %v325, 48
        %v1257 = vpop.permute.xlu0 %1256
        %1258 = vrot.lane.b32.xlu0 %v330, 48
        %v1259 = vpop.permute.xlu0 %1258
        %v1263 = vsel %vm425, %v1254, 0
        %v1266 = vsel %vm425, %v1255, 0
        %1268 = vmatprep.subr.mxu0 0.0
        %1269 = vmatpush1.msra.mxu0 %v1257
        %1270 = vmatprep.subr.mxu0 0.0
        %1271 = vmatpush1.msra.mxu0 %v1259
        %1272 = vmatprep.subr.mxu0 0.0
        %1273 = vmatpush1.msra.mxu0 0.0
        %1274 = vmatprep.subr.mxu0 0.0
        %1275 = vmatpush1.msra.mxu0 0.0
        %1276 = vmatprep.subr.mxu0 0.0
        %1277 = vmatpush1.msra.mxu0 0.0
        %1278 = vmatprep.subr.mxu0 0.0
        %1279 = vmatpush1.msra.mxu0 0.0
        %1280 = vmatprep.subr.mxu0 0.0
        %1281 = vmatpush1.msra.mxu0 0.0
        %1282 = vmatprep.subr.mxu0 0.0
        %1283 = vmatpush1.msra.mxu0 0.0
        %1284 = vmatprep.subr.mxu0 0.0
        %1285 = vmatpush1.msra.mxu0 0.0
        %1286 = vmatprep.subr.mxu0 0.0
        %1287 = vmatpush1.msra.mxu0 0.0
        %1288 = vmatprep.subr.mxu0 0.0
        %1289 = vmatpush1.msra.mxu0 0.0
        %1290 = vmatprep.subr.mxu0 0.0
        %1291 = vmatpush1.msra.mxu0 0.0
        %1292 = vmatprep.subr.mxu0 0.0
        %1293 = vmatpush1.msra.mxu0 0.0
        %1294 = vmatprep.subr.mxu0 0.0
        %1295 = vmatpush1.msra.mxu0 0.0
        %1296 = vmatprep.subr.mxu0 0.0
        %1297 = vmatpush1.msra.mxu0 0.0
        %1298 = vmatprep.subr.mxu0 0.0
        %1299 = vmatpush1.msra.mxu0 0.0
        %1300 = vmatprep.subr.mxu0 0.0
        %1301 = vmatpush1.msra.mxu0 0.0
        %1302 = vmatprep.subr.mxu0 0.0
        %1303 = vmatpush1.msra.mxu0 0.0
        %1304 = vmatprep.subr.mxu0 0.0
        %1305 = vmatpush1.msra.mxu0 0.0
        %1306 = vmatprep.subr.mxu0 0.0
        %1307 = vmatpush1.msra.mxu0 0.0
        %1308 = vmatprep.subr.mxu0 0.0
        %1309 = vmatpush1.msra.mxu0 0.0
        %1310 = vmatprep.subr.mxu0 0.0
        %1311 = vmatpush1.msra.mxu0 0.0
        %1312 = vmatprep.subr.mxu0 0.0
        %1313 = vmatpush1.msra.mxu0 0.0
        %1314 = vmatprep.subr.mxu0 0.0
        %1315 = vmatpush1.msra.mxu0 0.0
        %1316 = vmatprep.subr.mxu0 0.0
        %1317 = vmatpush1.msra.mxu0 0.0
        %1318 = vmatprep.subr.mxu0 0.0
        %1319 = vmatpush1.msra.mxu0 0.0
        %1320 = vmatprep.subr.mxu0 0.0
        %1321 = vmatpush1.msra.mxu0 0.0
        %1322 = vmatprep.subr.mxu0 0.0
        %1323 = vmatpush1.msra.mxu0 0.0
        %1324 = vmatprep.subr.mxu0 0.0
        %1325 = vmatpush1.msra.mxu0 0.0
        %1326 = vmatprep.subr.mxu0 0.0
        %1327 = vmatpush1.msra.mxu0 0.0
        %1328 = vmatprep.subr.mxu0 0.0
        %1329 = vmatpush1.msra.mxu0 0.0
        %1330 = vmatprep.subr.mxu0 0.0
        %1331 = vmatpush1.msra.mxu0 0.0
        %1332 = vmatprep.mubr.f32.mxu0 0.0
        %1333 = vmatmul.mubr.f32.gmra.mrb[0].mxu0 %v1263
        %v1334 = vpop.f32.mrb[0].mxu0
        %v1335 = vadd.f32 0.0, %v1334
        %v1336 = vpop.f32.mrb[0].mxu0
        %1337 = vmatprep.mubr.f32.mxu0 0.0
        %1338 = vmatmul.mubr.f32.gmra.mrb[0].mxu0 %v1266
        %v1339 = vpop.f32.mrb[0].mxu0
        %v1340 = vadd.f32 0.0, %v1339
        %v1341 = vpop.f32.mrb[0].mxu0
        %1342 = vdwg.mxu0
        %1343 = vrot.lane.b32.xlu0 %v325, 108
        %v1344 = vpop.permute.xlu0 %1343
        %1345 = vrot.lane.b32.xlu0 %v330, 108
        %v1346 = vpop.permute.xlu0 %1345
        %1347 = vrot.lane.b32.xlu0 %v325, 76
        %v1348 = vpop.permute.xlu0 %1347
        %1349 = vrot.lane.b32.xlu0 %v330, 76
        %v1350 = vpop.permute.xlu0 %1349
        %v1351 = vsel %vm339, %v1344, 0
        %v1353 = vsel %vm339, %v1346, 0
        %v1355 = vsel %vm339, %v1348, 0
        %v1357 = vsel %vm339, %v1350, 0
        %1359 = vmatprep.subr.mxu0 0.0
        %1360 = vmatpush1.xpose.msra.mxu0 %v1355
        %1361 = vmatprep.subr.mxu0 0.0
        %1362 = vmatpush1.xpose.msra.mxu0 %v1357
        %1363 = vmatprep.subr.mxu0 0.0
        %1364 = vmatpush1.xpose.msra.mxu0 0.0
        %1365 = vmatprep.subr.mxu0 0.0
        %1366 = vmatpush1.xpose.msra.mxu0 0.0
        %1367 = vmatprep.subr.mxu0 0.0
        %1368 = vmatpush1.xpose.msra.mxu0 0.0
        %1369 = vmatprep.subr.mxu0 0.0
        %1370 = vmatpush1.xpose.msra.mxu0 0.0
        %1371 = vmatprep.subr.mxu0 0.0
        %1372 = vmatpush1.xpose.msra.mxu0 0.0
        %1373 = vmatprep.subr.mxu0 0.0
        %1374 = vmatpush1.xpose.msra.mxu0 0.0
        %1375 = vmatprep.subr.mxu0 0.0
        %1376 = vmatpush1.xpose.msra.mxu0 0.0
        %1377 = vmatprep.subr.mxu0 0.0
        %1378 = vmatpush1.xpose.msra.mxu0 0.0
        %1379 = vmatprep.subr.mxu0 0.0
        %1380 = vmatpush1.xpose.msra.mxu0 0.0
        %1381 = vmatprep.subr.mxu0 0.0
        %1382 = vmatpush1.xpose.msra.mxu0 0.0
        %1383 = vmatprep.subr.mxu0 0.0
        %1384 = vmatpush1.xpose.msra.mxu0 0.0
        %1385 = vmatprep.subr.mxu0 0.0
        %1386 = vmatpush1.xpose.msra.mxu0 0.0
        %1387 = vmatprep.subr.mxu0 0.0
        %1388 = vmatpush1.xpose.msra.mxu0 0.0
        %1389 = vmatprep.subr.mxu0 0.0
        %1390 = vmatpush1.xpose.msra.mxu0 0.0
        %1391 = vmatprep.subr.mxu0 0.0
        %1392 = vmatpush1.xpose.msra.mxu0 0.0
        %1393 = vmatprep.subr.mxu0 0.0
        %1394 = vmatpush1.xpose.msra.mxu0 0.0
        %1395 = vmatprep.subr.mxu0 0.0
        %1396 = vmatpush1.xpose.msra.mxu0 0.0
        %1397 = vmatprep.subr.mxu0 0.0
        %1398 = vmatpush1.xpose.msra.mxu0 0.0
        %1399 = vmatprep.subr.mxu0 0.0
        %1400 = vmatpush1.xpose.msra.mxu0 0.0
        %1401 = vmatprep.subr.mxu0 0.0
        %1402 = vmatpush1.xpose.msra.mxu0 0.0
        %1403 = vmatprep.subr.mxu0 0.0
        %1404 = vmatpush1.xpose.msra.mxu0 0.0
        %1405 = vmatprep.subr.mxu0 0.0
        %1406 = vmatpush1.xpose.msra.mxu0 0.0
        %1407 = vmatprep.subr.mxu0 0.0
        %1408 = vmatpush1.xpose.msra.mxu0 0.0
        %1409 = vmatprep.subr.mxu0 0.0
        %1410 = vmatpush1.xpose.msra.mxu0 0.0
        %1411 = vmatprep.subr.mxu0 0.0
        %1412 = vmatpush1.xpose.msra.mxu0 0.0
        %1413 = vmatprep.subr.mxu0 0.0
        %1414 = vmatpush1.xpose.msra.mxu0 0.0
        %1415 = vmatprep.subr.mxu0 0.0
        %1416 = vmatpush1.xpose.msra.mxu0 0.0
        %1417 = vmatprep.subr.mxu0 0.0
        %1418 = vmatpush1.xpose.msra.mxu0 0.0
        %1419 = vmatprep.subr.mxu0 0.0
        %1420 = vmatpush1.xpose.msra.mxu0 0.0
        %1421 = vmatprep.subr.mxu0 0.0
        %1422 = vmatpush1.xpose.msra.mxu0 0.0
        %1423 = vmatprep.mubr.f32.mxu0 0.0
        %1424 = vmatmul.mubr.f32.gmra.mrb[0].mxu0 %v1351
        %v1425 = vpop.f32.mrb[0].mxu0
        %v1426 = vadd.f32 0.0, %v1425
        %v1427 = vpop.f32.mrb[0].mxu0
        %1428 = vmatprep.mubr.f32.mxu0 0.0
        %1429 = vmatmul.mubr.f32.gmra.mrb[0].mxu0 %v1353
        %v1430 = vpop.f32.mrb[0].mxu0
        %v1431 = vadd.f32 0.0, %v1430
        %v1432 = vpop.f32.mrb[0].mxu0
        %1433 = vdwg.mxu0
        %v1434 = vmul.f32 %v1426, 0.5
        %v1435 = vmul.f32 %v1431, 0.5
        %v1436 = vsel %vm425, %v1434, -inf
        %1437 = vmax.xlane.f32.xlu0 %v1436
        %v1438 = vpop.xlane.xlu0 %1437
        %v1439 = vsel %vm425, %v1435, -inf
        %1440 = vmax.xlane.f32.xlu0 %v1439
        %v1441 = vpop.xlane.xlu0 %1440
        %v1442 = vsub.f32 %v1434, %v1438
        %v1443 = vsub.f32 %v1435, %v1441
        %v1444 = vmul.f32 %v1442, 1.442695
        %v1445 = vpow.pop %v1444
        %v1446 = vmul.f32 %v1443, 1.442695
        %v1447 = vpow.pop %v1446
        %v1448 = vsel %vm425, %v1445, 0.0
        %1449 = vadd.xlane.f32.xlu0 %v1448
        %v1450 = vpop.xlane.xlu0 %1449
        %v1451 = vsel %vm425, %v1447, 0.0
        %1452 = vadd.xlane.f32.xlu0 %v1451
        %v1453 = vpop.xlane.xlu0 %1452
        %v1454 = vrcp.pop %v1450
        %v1455 = vrcp.pop %v1453
        %v1456 = vmul.f32 %v1445, %v1454
        %v1457 = vmul.f32 %v1447, %v1455
        %1458 = vrot.lane.b32.xlu0 %v325, 44
        %v1459 = vpop.permute.xlu0 %1458
        %1460 = vrot.lane.b32.xlu0 %v330, 44
        %v1461 = vpop.permute.xlu0 %1460
        %v1465 = vsel %vm425, %v1456, 0
        %v1468 = vsel %vm425, %v1457, 0
        %1470 = vmatprep.subr.mxu0 0.0
        %1471 = vmatpush1.msra.mxu0 %v1459
        %1472 = vmatprep.subr.mxu0 0.0
        %1473 = vmatpush1.msra.mxu0 %v1461
        %1474 = vmatprep.subr.mxu0 0.0
        %1475 = vmatpush1.msra.mxu0 0.0
        %1476 = vmatprep.subr.mxu0 0.0
        %1477 = vmatpush1.msra.mxu0 0.0
        %1478 = vmatprep.subr.mxu0 0.0
        %1479 = vmatpush1.msra.mxu0 0.0
        %1480 = vmatprep.subr.mxu0 0.0
        %1481 = vmatpush1.msra.mxu0 0.0
        %1482 = vmatprep.subr.mxu0 0.0
        %1483 = vmatpush1.msra.mxu0 0.0
        %1484 = vmatprep.subr.mxu0 0.0
        %1485 = vmatpush1.msra.mxu0 0.0
        %1486 = vmatprep.subr.mxu0 0.0
        %1487 = vmatpush1.msra.mxu0 0.0
        %1488 = vmatprep.subr.mxu0 0.0
        %1489 = vmatpush1.msra.mxu0 0.0
        %1490 = vmatprep.subr.mxu0 0.0
        %1491 = vmatpush1.msra.mxu0 0.0
        %1492 = vmatprep.subr.mxu0 0.0
        %1493 = vmatpush1.msra.mxu0 0.0
        %1494 = vmatprep.subr.mxu0 0.0
        %1495 = vmatpush1.msra.mxu0 0.0
        %1496 = vmatprep.subr.mxu0 0.0
        %1497 = vmatpush1.msra.mxu0 0.0
        %1498 = vmatprep.subr.mxu0 0.0
        %1499 = vmatpush1.msra.mxu0 0.0
        %1500 = vmatprep.subr.mxu0 0.0
        %1501 = vmatpush1.msra.mxu0 0.0
        %1502 = vmatprep.subr.mxu0 0.0
        %1503 = vmatpush1.msra.mxu0 0.0
        %1504 = vmatprep.subr.mxu0 0.0
        %1505 = vmatpush1.msra.mxu0 0.0
        %1506 = vmatprep.subr.mxu0 0.0
        %1507 = vmatpush1.msra.mxu0 0.0
        %1508 = vmatprep.subr.mxu0 0.0
        %1509 = vmatpush1.msra.mxu0 0.0
        %1510 = vmatprep.subr.mxu0 0.0
        %1511 = vmatpush1.msra.mxu0 0.0
        %1512 = vmatprep.subr.mxu0 0.0
        %1513 = vmatpush1.msra.mxu0 0.0
        %1514 = vmatprep.subr.mxu0 0.0
        %1515 = vmatpush1.msra.mxu0 0.0
        %1516 = vmatprep.subr.mxu0 0.0
        %1517 = vmatpush1.msra.mxu0 0.0
        %1518 = vmatprep.subr.mxu0 0.0
        %1519 = vmatpush1.msra.mxu0 0.0
        %1520 = vmatprep.subr.mxu0 0.0
        %1521 = vmatpush1.msra.mxu0 0.0
        %1522 = vmatprep.subr.mxu0 0.0
        %1523 = vmatpush1.msra.mxu0 0.0
        %1524 = vmatprep.subr.mxu0 0.0
        %1525 = vmatpush1.msra.mxu0 0.0
        %1526 = vmatprep.subr.mxu0 0.0
        %1527 = vmatpush1.msra.mxu0 0.0
        %1528 = vmatprep.subr.mxu0 0.0
        %1529 = vmatpush1.msra.mxu0 0.0
        %1530 = vmatprep.subr.mxu0 0.0
        %1531 = vmatpush1.msra.mxu0 0.0
        %1532 = vmatprep.subr.mxu0 0.0
        %1533 = vmatpush1.msra.mxu0 0.0
        %1534 = vmatprep.mubr.f32.mxu0 0.0
        %1535 = vmatmul.mubr.f32.gmra.mrb[0].mxu0 %v1465
        %v1536 = vpop.f32.mrb[0].mxu0
        %v1537 = vadd.f32 0.0, %v1536
        %v1538 = vpop.f32.mrb[0].mxu0
        %1539 = vmatprep.mubr.f32.mxu0 0.0
        %1540 = vmatmul.mubr.f32.gmra.mrb[0].mxu0 %v1468
        %v1541 = vpop.f32.mrb[0].mxu0
        %v1542 = vadd.f32 0.0, %v1541
        %v1543 = vpop.f32.mrb[0].mxu0
        %1544 = vdwg.mxu0
        %1545 = vrot.lane.b32.xlu0 %v325, 104
        %v1546 = vpop.permute.xlu0 %1545
        %1547 = vrot.lane.b32.xlu0 %v330, 104
        %v1548 = vpop.permute.xlu0 %1547
        %1549 = vrot.lane.b32.xlu0 %v325, 72
        %v1550 = vpop.permute.xlu0 %1549
        %1551 = vrot.lane.b32.xlu0 %v330, 72
        %v1552 = vpop.permute.xlu0 %1551
        %v1553 = vsel %vm339, %v1546, 0
        %v1555 = vsel %vm339, %v1548, 0
        %v1557 = vsel %vm339, %v1550, 0
        %v1559 = vsel %vm339, %v1552, 0
        %1561 = vmatprep.subr.mxu0 0.0
        %1562 = vmatpush1.xpose.msra.mxu0 %v1557
        %1563 = vmatprep.subr.mxu0 0.0
        %1564 = vmatpush1.xpose.msra.mxu0 %v1559
        %1565 = vmatprep.subr.mxu0 0.0
        %1566 = vmatpush1.xpose.msra.mxu0 0.0
        %1567 = vmatprep.subr.mxu0 0.0
        %1568 = vmatpush1.xpose.msra.mxu0 0.0
        %1569 = vmatprep.subr.mxu0 0.0
        %1570 = vmatpush1.xpose.msra.mxu0 0.0
        %1571 = vmatprep.subr.mxu0 0.0
        %1572 = vmatpush1.xpose.msra.mxu0 0.0
        %1573 = vmatprep.subr.mxu0 0.0
        %1574 = vmatpush1.xpose.msra.mxu0 0.0
        %1575 = vmatprep.subr.mxu0 0.0
        %1576 = vmatpush1.xpose.msra.mxu0 0.0
        %1577 = vmatprep.subr.mxu0 0.0
        %1578 = vmatpush1.xpose.msra.mxu0 0.0
        %1579 = vmatprep.subr.mxu0 0.0
        %1580 = vmatpush1.xpose.msra.mxu0 0.0
        %1581 = vmatprep.subr.mxu0 0.0
        %1582 = vmatpush1.xpose.msra.mxu0 0.0
        %1583 = vmatprep.subr.mxu0 0.0
        %1584 = vmatpush1.xpose.msra.mxu0 0.0
        %1585 = vmatprep.subr.mxu0 0.0
        %1586 = vmatpush1.xpose.msra.mxu0 0.0
        %1587 = vmatprep.subr.mxu0 0.0
        %1588 = vmatpush1.xpose.msra.mxu0 0.0
        %1589 = vmatprep.subr.mxu0 0.0
        %1590 = vmatpush1.xpose.msra.mxu0 0.0
        %1591 = vmatprep.subr.mxu0 0.0
        %1592 = vmatpush1.xpose.msra.mxu0 0.0
        %1593 = vmatprep.subr.mxu0 0.0
        %1594 = vmatpush1.xpose.msra.mxu0 0.0
        %1595 = vmatprep.subr.mxu0 0.0
        %1596 = vmatpush1.xpose.msra.mxu0 0.0
        %1597 = vmatprep.subr.mxu0 0.0
        %1598 = vmatpush1.xpose.msra.mxu0 0.0
        %1599 = vmatprep.subr.mxu0 0.0
        %1600 = vmatpush1.xpose.msra.mxu0 0.0
        %1601 = vmatprep.subr.mxu0 0.0
        %1602 = vmatpush1.xpose.msra.mxu0 0.0
        %1603 = vmatprep.subr.mxu0 0.0
        %1604 = vmatpush1.xpose.msra.mxu0 0.0
        %1605 = vmatprep.subr.mxu0 0.0
        %1606 = vmatpush1.xpose.msra.mxu0 0.0
        %1607 = vmatprep.subr.mxu0 0.0
        %1608 = vmatpush1.xpose.msra.mxu0 0.0
        %1609 = vmatprep.subr.mxu0 0.0
        %1610 = vmatpush1.xpose.msra.mxu0 0.0
        %1611 = vmatprep.subr.mxu0 0.0
        %1612 = vmatpush1.xpose.msra.mxu0 0.0
        %1613 = vmatprep.subr.mxu0 0.0
        %1614 = vmatpush1.xpose.msra.mxu0 0.0
        %1615 = vmatprep.subr.mxu0 0.0
        %1616 = vmatpush1.xpose.msra.mxu0 0.0
        %1617 = vmatprep.subr.mxu0 0.0
        %1618 = vmatpush1.xpose.msra.mxu0 0.0
        %1619 = vmatprep.subr.mxu0 0.0
        %1620 = vmatpush1.xpose.msra.mxu0 0.0
        %1621 = vmatprep.subr.mxu0 0.0
        %1622 = vmatpush1.xpose.msra.mxu0 0.0
        %1623 = vmatprep.subr.mxu0 0.0
        %1624 = vmatpush1.xpose.msra.mxu0 0.0
        %1625 = vmatprep.mubr.f32.mxu0 0.0
        %1626 = vmatmul.mubr.f32.gmra.mrb[0].mxu0 %v1553
        %v1627 = vpop.f32.mrb[0].mxu0
        %v1628 = vadd.f32 0.0, %v1627
        %v1629 = vpop.f32.mrb[0].mxu0
        %1630 = vmatprep.mubr.f32.mxu0 0.0
        %1631 = vmatmul.mubr.f32.gmra.mrb[0].mxu0 %v1555
        %v1632 = vpop.f32.mrb[0].mxu0
        %v1633 = vadd.f32 0.0, %v1632
        %v1634 = vpop.f32.mrb[0].mxu0
        %1635 = vdwg.mxu0
        %v1636 = vmul.f32 %v1628, 0.5
        %v1637 = vmul.f32 %v1633, 0.5
        %v1638 = vsel %vm425, %v1636, -inf
        %1639 = vmax.xlane.f32.xlu0 %v1638
        %v1640 = vpop.xlane.xlu0 %1639
        %v1641 = vsel %vm425, %v1637, -inf
        %1642 = vmax.xlane.f32.xlu0 %v1641
        %v1643 = vpop.xlane.xlu0 %1642
        %v1644 = vsub.f32 %v1636, %v1640
        %v1645 = vsub.f32 %v1637, %v1643
        %v1646 = vmul.f32 %v1644, 1.442695
        %v1647 = vpow.pop %v1646
        %v1648 = vmul.f32 %v1645, 1.442695
        %v1649 = vpow.pop %v1648
        %v1650 = vsel %vm425, %v1647, 0.0
        %1651 = vadd.xlane.f32.xlu0 %v1650
        %v1652 = vpop.xlane.xlu0 %1651
        %v1653 = vsel %vm425, %v1649, 0.0
        %1654 = vadd.xlane.f32.xlu0 %v1653
        %v1655 = vpop.xlane.xlu0 %1654
        %v1656 = vrcp.pop %v1652
        %v1657 = vrcp.pop %v1655
        %v1658 = vmul.f32 %v1647, %v1656
        %v1659 = vmul.f32 %v1649, %v1657
        %1660 = vrot.lane.b32.xlu0 %v325, 40
        %v1661 = vpop.permute.xlu0 %1660
        %1662 = vrot.lane.b32.xlu0 %v330, 40
        %v1663 = vpop.permute.xlu0 %1662
        %v1667 = vsel %vm425, %v1658, 0
        %v1670 = vsel %vm425, %v1659, 0
        %1672 = vmatprep.subr.mxu0 0.0
        %1673 = vmatpush1.msra.mxu0 %v1661
        %1674 = vmatprep.subr.mxu0 0.0
        %1675 = vmatpush1.msra.mxu0 %v1663
        %1676 = vmatprep.subr.mxu0 0.0
        %1677 = vmatpush1.msra.mxu0 0.0
        %1678 = vmatprep.subr.mxu0 0.0
        %1679 = vmatpush1.msra.mxu0 0.0
        %1680 = vmatprep.subr.mxu0 0.0
        %1681 = vmatpush1.msra.mxu0 0.0
        %1682 = vmatprep.subr.mxu0 0.0
        %1683 = vmatpush1.msra.mxu0 0.0
        %1684 = vmatprep.subr.mxu0 0.0
        %1685 = vmatpush1.msra.mxu0 0.0
        %1686 = vmatprep.subr.mxu0 0.0
        %1687 = vmatpush1.msra.mxu0 0.0
        %1688 = vmatprep.subr.mxu0 0.0
        %1689 = vmatpush1.msra.mxu0 0.0
        %1690 = vmatprep.subr.mxu0 0.0
        %1691 = vmatpush1.msra.mxu0 0.0
        %1692 = vmatprep.subr.mxu0 0.0
        %1693 = vmatpush1.msra.mxu0 0.0
        %1694 = vmatprep.subr.mxu0 0.0
        %1695 = vmatpush1.msra.mxu0 0.0
        %1696 = vmatprep.subr.mxu0 0.0
        %1697 = vmatpush1.msra.mxu0 0.0
        %1698 = vmatprep.subr.mxu0 0.0
        %1699 = vmatpush1.msra.mxu0 0.0
        %1700 = vmatprep.subr.mxu0 0.0
        %1701 = vmatpush1.msra.mxu0 0.0
        %1702 = vmatprep.subr.mxu0 0.0
        %1703 = vmatpush1.msra.mxu0 0.0
        %1704 = vmatprep.subr.mxu0 0.0
        %1705 = vmatpush1.msra.mxu0 0.0
        %1706 = vmatprep.subr.mxu0 0.0
        %1707 = vmatpush1.msra.mxu0 0.0
        %1708 = vmatprep.subr.mxu0 0.0
        %1709 = vmatpush1.msra.mxu0 0.0
        %1710 = vmatprep.subr.mxu0 0.0
        %1711 = vmatpush1.msra.mxu0 0.0
        %1712 = vmatprep.subr.mxu0 0.0
        %1713 = vmatpush1.msra.mxu0 0.0
        %1714 = vmatprep.subr.mxu0 0.0
        %1715 = vmatpush1.msra.mxu0 0.0
        %1716 = vmatprep.subr.mxu0 0.0
        %1717 = vmatpush1.msra.mxu0 0.0
        %1718 = vmatprep.subr.mxu0 0.0
        %1719 = vmatpush1.msra.mxu0 0.0
        %1720 = vmatprep.subr.mxu0 0.0
        %1721 = vmatpush1.msra.mxu0 0.0
        %1722 = vmatprep.subr.mxu0 0.0
        %1723 = vmatpush1.msra.mxu0 0.0
        %1724 = vmatprep.subr.mxu0 0.0
        %1725 = vmatpush1.msra.mxu0 0.0
        %1726 = vmatprep.subr.mxu0 0.0
        %1727 = vmatpush1.msra.mxu0 0.0
        %1728 = vmatprep.subr.mxu0 0.0
        %1729 = vmatpush1.msra.mxu0 0.0
        %1730 = vmatprep.subr.mxu0 0.0
        %1731 = vmatpush1.msra.mxu0 0.0
        %1732 = vmatprep.subr.mxu0 0.0
        %1733 = vmatpush1.msra.mxu0 0.0
        %1734 = vmatprep.subr.mxu0 0.0
        %1735 = vmatpush1.msra.mxu0 0.0
        %1736 = vmatprep.mubr.f32.mxu0 0.0
        %1737 = vmatmul.mubr.f32.gmra.mrb[0].mxu0 %v1667
        %v1738 = vpop.f32.mrb[0].mxu0
        %v1739 = vadd.f32 0.0, %v1738
        %v1740 = vpop.f32.mrb[0].mxu0
        %1741 = vmatprep.mubr.f32.mxu0 0.0
        %1742 = vmatmul.mubr.f32.gmra.mrb[0].mxu0 %v1670
        %v1743 = vpop.f32.mrb[0].mxu0
        %v1744 = vadd.f32 0.0, %v1743
        %v1745 = vpop.f32.mrb[0].mxu0
        %1746 = vdwg.mxu0
        %1747 = vrot.lane.b32.xlu0 %v325, 100
        %v1748 = vpop.permute.xlu0 %1747
        %1749 = vrot.lane.b32.xlu0 %v330, 100
        %v1750 = vpop.permute.xlu0 %1749
        %1751 = vrot.lane.b32.xlu0 %v325, 68
        %v1752 = vpop.permute.xlu0 %1751
        %1753 = vrot.lane.b32.xlu0 %v330, 68
        %v1754 = vpop.permute.xlu0 %1753
        %v1755 = vsel %vm339, %v1748, 0
        %v1757 = vsel %vm339, %v1750, 0
        %v1759 = vsel %vm339, %v1752, 0
        %v1761 = vsel %vm339, %v1754, 0
        %1763 = vmatprep.subr.mxu0 0.0
        %1764 = vmatpush1.xpose.msra.mxu0 %v1759
        %1765 = vmatprep.subr.mxu0 0.0
        %1766 = vmatpush1.xpose.msra.mxu0 %v1761
        %1767 = vmatprep.subr.mxu0 0.0
        %1768 = vmatpush1.xpose.msra.mxu0 0.0
        %1769 = vmatprep.subr.mxu0 0.0
        %1770 = vmatpush1.xpose.msra.mxu0 0.0
        %1771 = vmatprep.subr.mxu0 0.0
        %1772 = vmatpush1.xpose.msra.mxu0 0.0
        %1773 = vmatprep.subr.mxu0 0.0
        %1774 = vmatpush1.xpose.msra.mxu0 0.0
        %1775 = vmatprep.subr.mxu0 0.0
        %1776 = vmatpush1.xpose.msra.mxu0 0.0
        %1777 = vmatprep.subr.mxu0 0.0
        %1778 = vmatpush1.xpose.msra.mxu0 0.0
        %1779 = vmatprep.subr.mxu0 0.0
        %1780 = vmatpush1.xpose.msra.mxu0 0.0
        %1781 = vmatprep.subr.mxu0 0.0
        %1782 = vmatpush1.xpose.msra.mxu0 0.0
        %1783 = vmatprep.subr.mxu0 0.0
        %1784 = vmatpush1.xpose.msra.mxu0 0.0
        %1785 = vmatprep.subr.mxu0 0.0
        %1786 = vmatpush1.xpose.msra.mxu0 0.0
        %1787 = vmatprep.subr.mxu0 0.0
        %1788 = vmatpush1.xpose.msra.mxu0 0.0
        %1789 = vmatprep.subr.mxu0 0.0
        %1790 = vmatpush1.xpose.msra.mxu0 0.0
        %1791 = vmatprep.subr.mxu0 0.0
        %1792 = vmatpush1.xpose.msra.mxu0 0.0
        %1793 = vmatprep.subr.mxu0 0.0
        %1794 = vmatpush1.xpose.msra.mxu0 0.0
        %1795 = vmatprep.subr.mxu0 0.0
        %1796 = vmatpush1.xpose.msra.mxu0 0.0
        %1797 = vmatprep.subr.mxu0 0.0
        %1798 = vmatpush1.xpose.msra.mxu0 0.0
        %1799 = vmatprep.subr.mxu0 0.0
        %1800 = vmatpush1.xpose.msra.mxu0 0.0
        %1801 = vmatprep.subr.mxu0 0.0
        %1802 = vmatpush1.xpose.msra.mxu0 0.0
        %1803 = vmatprep.subr.mxu0 0.0
        %1804 = vmatpush1.xpose.msra.mxu0 0.0
        %1805 = vmatprep.subr.mxu0 0.0
        %1806 = vmatpush1.xpose.msra.mxu0 0.0
        %1807 = vmatprep.subr.mxu0 0.0
        %1808 = vmatpush1.xpose.msra.mxu0 0.0
        %1809 = vmatprep.subr.mxu0 0.0
        %1810 = vmatpush1.xpose.msra.mxu0 0.0
        %1811 = vmatprep.subr.mxu0 0.0
        %1812 = vmatpush1.xpose.msra.mxu0 0.0
        %1813 = vmatprep.subr.mxu0 0.0
        %1814 = vmatpush1.xpose.msra.mxu0 0.0
        %1815 = vmatprep.subr.mxu0 0.0
        %1816 = vmatpush1.xpose.msra.mxu0 0.0
        %1817 = vmatprep.subr.mxu0 0.0
        %1818 = vmatpush1.xpose.msra.mxu0 0.0
        %1819 = vmatprep.subr.mxu0 0.0
        %1820 = vmatpush1.xpose.msra.mxu0 0.0
        %1821 = vmatprep.subr.mxu0 0.0
        %1822 = vmatpush1.xpose.msra.mxu0 0.0
        %1823 = vmatprep.subr.mxu0 0.0
        %1824 = vmatpush1.xpose.msra.mxu0 0.0
        %1825 = vmatprep.subr.mxu0 0.0
        %1826 = vmatpush1.xpose.msra.mxu0 0.0
        %1827 = vmatprep.mubr.f32.mxu0 0.0
        %1828 = vmatmul.mubr.f32.gmra.mrb[0].mxu0 %v1755
        %v1829 = vpop.f32.mrb[0].mxu0
        %v1830 = vadd.f32 0.0, %v1829
        %v1831 = vpop.f32.mrb[0].mxu0
        %1832 = vmatprep.mubr.f32.mxu0 0.0
        %1833 = vmatmul.mubr.f32.gmra.mrb[0].mxu0 %v1757
        %v1834 = vpop.f32.mrb[0].mxu0
        %v1835 = vadd.f32 0.0, %v1834
        %v1836 = vpop.f32.mrb[0].mxu0
        %1837 = vdwg.mxu0
        %v1838 = vmul.f32 %v1830, 0.5
        %v1839 = vmul.f32 %v1835, 0.5
        %v1840 = vsel %vm425, %v1838, -inf
        %1841 = vmax.xlane.f32.xlu0 %v1840
        %v1842 = vpop.xlane.xlu0 %1841
        %v1843 = vsel %vm425, %v1839, -inf
        %1844 = vmax.xlane.f32.xlu0 %v1843
        %v1845 = vpop.xlane.xlu0 %1844
        %v1846 = vsub.f32 %v1838, %v1842
        %v1847 = vsub.f32 %v1839, %v1845
        %v1848 = vmul.f32 %v1846, 1.442695
        %v1849 = vpow.pop %v1848
        %v1850 = vmul.f32 %v1847, 1.442695
        %v1851 = vpow.pop %v1850
        %v1852 = vsel %vm425, %v1849, 0.0
        %1853 = vadd.xlane.f32.xlu0 %v1852
        %v1854 = vpop.xlane.xlu0 %1853
        %v1855 = vsel %vm425, %v1851, 0.0
        %1856 = vadd.xlane.f32.xlu0 %v1855
        %v1857 = vpop.xlane.xlu0 %1856
        %v1858 = vrcp.pop %v1854
        %v1859 = vrcp.pop %v1857
        %v1860 = vmul.f32 %v1849, %v1858
        %v1861 = vmul.f32 %v1851, %v1859
        %1862 = vrot.lane.b32.xlu0 %v325, 36
        %v1863 = vpop.permute.xlu0 %1862
        %1864 = vrot.lane.b32.xlu0 %v330, 36
        %v1865 = vpop.permute.xlu0 %1864
        %v1869 = vsel %vm425, %v1860, 0
        %v1872 = vsel %vm425, %v1861, 0
        %1874 = vmatprep.subr.mxu0 0.0
        %1875 = vmatpush1.msra.mxu0 %v1863
        %1876 = vmatprep.subr.mxu0 0.0
        %1877 = vmatpush1.msra.mxu0 %v1865
        %1878 = vmatprep.subr.mxu0 0.0
        %1879 = vmatpush1.msra.mxu0 0.0
        %1880 = vmatprep.subr.mxu0 0.0
        %1881 = vmatpush1.msra.mxu0 0.0
        %1882 = vmatprep.subr.mxu0 0.0
        %1883 = vmatpush1.msra.mxu0 0.0
        %1884 = vmatprep.subr.mxu0 0.0
        %1885 = vmatpush1.msra.mxu0 0.0
        %1886 = vmatprep.subr.mxu0 0.0
        %1887 = vmatpush1.msra.mxu0 0.0
        %1888 = vmatprep.subr.mxu0 0.0
        %1889 = vmatpush1.msra.mxu0 0.0
        %1890 = vmatprep.subr.mxu0 0.0
        %1891 = vmatpush1.msra.mxu0 0.0
        %1892 = vmatprep.subr.mxu0 0.0
        %1893 = vmatpush1.msra.mxu0 0.0
        %1894 = vmatprep.subr.mxu0 0.0
        %1895 = vmatpush1.msra.mxu0 0.0
        %1896 = vmatprep.subr.mxu0 0.0
        %1897 = vmatpush1.msra.mxu0 0.0
        %1898 = vmatprep.subr.mxu0 0.0
        %1899 = vmatpush1.msra.mxu0 0.0
        %1900 = vmatprep.subr.mxu0 0.0
        %1901 = vmatpush1.msra.mxu0 0.0
        %1902 = vmatprep.subr.mxu0 0.0
        %1903 = vmatpush1.msra.mxu0 0.0
        %1904 = vmatprep.subr.mxu0 0.0
        %1905 = vmatpush1.msra.mxu0 0.0
        %1906 = vmatprep.subr.mxu0 0.0
        %1907 = vmatpush1.msra.mxu0 0.0
        %1908 = vmatprep.subr.mxu0 0.0
        %1909 = vmatpush1.msra.mxu0 0.0
        %1910 = vmatprep.subr.mxu0 0.0
        %1911 = vmatpush1.msra.mxu0 0.0
        %1912 = vmatprep.subr.mxu0 0.0
        %1913 = vmatpush1.msra.mxu0 0.0
        %1914 = vmatprep.subr.mxu0 0.0
        %1915 = vmatpush1.msra.mxu0 0.0
        %1916 = vmatprep.subr.mxu0 0.0
        %1917 = vmatpush1.msra.mxu0 0.0
        %1918 = vmatprep.subr.mxu0 0.0
        %1919 = vmatpush1.msra.mxu0 0.0
        %1920 = vmatprep.subr.mxu0 0.0
        %1921 = vmatpush1.msra.mxu0 0.0
        %1922 = vmatprep.subr.mxu0 0.0
        %1923 = vmatpush1.msra.mxu0 0.0
        %1924 = vmatprep.subr.mxu0 0.0
        %1925 = vmatpush1.msra.mxu0 0.0
        %1926 = vmatprep.subr.mxu0 0.0
        %1927 = vmatpush1.msra.mxu0 0.0
        %1928 = vmatprep.subr.mxu0 0.0
        %1929 = vmatpush1.msra.mxu0 0.0
        %1930 = vmatprep.subr.mxu0 0.0
        %1931 = vmatpush1.msra.mxu0 0.0
        %1932 = vmatprep.subr.mxu0 0.0
        %1933 = vmatpush1.msra.mxu0 0.0
        %1934 = vmatprep.subr.mxu0 0.0
        %1935 = vmatpush1.msra.mxu0 0.0
        %1936 = vmatprep.subr.mxu0 0.0
        %1937 = vmatpush1.msra.mxu0 0.0
        %1938 = vmatprep.mubr.f32.mxu0 0.0
        %1939 = vmatmul.mubr.f32.gmra.mrb[0].mxu0 %v1869
        %v1940 = vpop.f32.mrb[0].mxu0
        %v1941 = vadd.f32 0.0, %v1940
        %v1942 = vpop.f32.mrb[0].mxu0
        %1943 = vmatprep.mubr.f32.mxu0 0.0
        %1944 = vmatmul.mubr.f32.gmra.mrb[0].mxu0 %v1872
        %v1945 = vpop.f32.mrb[0].mxu0
        %v1946 = vadd.f32 0.0, %v1945
        %v1947 = vpop.f32.mrb[0].mxu0
        %1948 = vdwg.mxu0
        %1951 = vrot.lane.b32.xlu0 %v729, 4
        %v1952 = vpop.permute.xlu0 %1951
        %1953 = vrot.lane.b32.xlu0 %v734, 4
        %v1954 = vpop.permute.xlu0 %1953
        %1959 = vrot.lane.b32.xlu0 %v931, 8
        %v1960 = vpop.permute.xlu0 %1959
        %1961 = vrot.lane.b32.xlu0 %v936, 8
        %v1962 = vpop.permute.xlu0 %1961
        %1967 = vrot.lane.b32.xlu0 %v1133, 12
        %v1968 = vpop.permute.xlu0 %1967
        %1969 = vrot.lane.b32.xlu0 %v1138, 12
        %v1970 = vpop.permute.xlu0 %1969
        %1975 = vrot.lane.b32.xlu0 %v1335, 16
        %v1976 = vpop.permute.xlu0 %1975
        %1977 = vrot.lane.b32.xlu0 %v1340, 16
        %v1978 = vpop.permute.xlu0 %1977
        %1983 = vrot.lane.b32.xlu0 %v1537, 20
        %v1984 = vpop.permute.xlu0 %1983
        %1985 = vrot.lane.b32.xlu0 %v1542, 20
        %v1986 = vpop.permute.xlu0 %1985
        %1991 = vrot.lane.b32.xlu0 %v1739, 24
        %v1992 = vpop.permute.xlu0 %1991
        %1993 = vrot.lane.b32.xlu0 %v1744, 24
        %v1994 = vpop.permute.xlu0 %1993
        %1999 = vrot.lane.b32.xlu0 %v1941, 28
        %v2000 = vpop.permute.xlu0 %1999
        %2001 = vrot.lane.b32.xlu0 %v1946, 28
        %v2002 = vpop.permute.xlu0 %2001
        %v2005 = vsel %vm339, %v527, %v1952
        %v2006 = vsel %vm339, %v532, %v1954
        %vm2007 = vcmask 64512
        %v2008 = vsel %vm2007, %v2005, %v1960
        %v2009 = vsel %vm2007, %v2006, %v1962
        %vm2010 = vcmask 97280
        %v2011 = vsel %vm2010, %v2008, %v1968
        %v2012 = vsel %vm2010, %v2009, %v1970
        %v2013 = vsel %vm425, %v2011, %v1976
        %v2014 = vsel %vm425, %v2012, %v1978
        %vm2015 = vcmask 162816
        %v2016 = vsel %vm2015, %v2013, %v1984
        %v2017 = vsel %vm2015, %v2014, %v1986
        %vm2018 = vcmask 195584
        %v2019 = vsel %vm2018, %v2016, %v1992
        %v2020 = vsel %vm2018, %v2017, %v1994
        %vm2021 = vcmask 228352
        %v2022 = vsel %vm2021, %v2019, %v2000
        %v2023 = vsel %vm2021, %v2020, %v2002
        %v2024 = vld [vmem:[#allocation7] sm:$0xff]
        %v2025 = vld [vmem:[#allocation7 + $0x8] sm:$0xff]
        %v2026 = vld [vmem:[#allocation7 + $0x10] sm:$0xff]
        %v2027 = vld [vmem:[#allocation7 + $0x18] sm:$0xff]
        %v2028 = vld [vmem:[%s3] sm:$0x1]
        %v2030 = vlaneseq
        %v2031 = vshrl.u32 %v2030, 7
        %v2032 = vsub.s32 0, %v2031
        %v2033 = vrot.slane %v2028, %v2032
        %v2036 = vsel %vm251, %v2022, 0
        %v2039 = vsel %vm251, %v2023, 0
        %2041 = vmatprep.subr.mxu0 0.0
        %2042 = vmatpush1.msra.mxu0 %v2024
        %2043 = vmatprep.subr.mxu0 0.0
        %2044 = vmatpush1.msra.mxu0 %v2025
        %2045 = vmatprep.subr.mxu0 0.0
        %2046 = vmatpush1.msra.mxu0 %v2026
        %2047 = vmatprep.subr.mxu0 0.0
        %2048 = vmatpush1.msra.mxu0 %v2027
        %2049 = vmatprep.subr.mxu0 0.0
        %2050 = vmatpush1.msra.mxu0 0.0
        %2051 = vmatprep.subr.mxu0 0.0
        %2052 = vmatpush1.msra.mxu0 0.0
        %2053 = vmatprep.subr.mxu0 0.0
        %2054 = vmatpush1.msra.mxu0 0.0
        %2055 = vmatprep.subr.mxu0 0.0
        %2056 = vmatpush1.msra.mxu0 0.0
        %2057 = vmatprep.subr.mxu0 0.0
        %2058 = vmatpush1.msra.mxu0 0.0
        %2059 = vmatprep.subr.mxu0 0.0
        %2060 = vmatpush1.msra.mxu0 0.0
        %2061 = vmatprep.subr.mxu0 0.0
        %2062 = vmatpush1.msra.mxu0 0.0
        %2063 = vmatprep.subr.mxu0 0.0
        %2064 = vmatpush1.msra.mxu0 0.0
        %2065 = vmatprep.subr.mxu0 0.0
        %2066 = vmatpush1.msra.mxu0 0.0
        %2067 = vmatprep.subr.mxu0 0.0
        %2068 = vmatpush1.msra.mxu0 0.0
        %2069 = vmatprep.subr.mxu0 0.0
        %2070 = vmatpush1.msra.mxu0 0.0
        %2071 = vmatprep.subr.mxu0 0.0
        %2072 = vmatpush1.msra.mxu0 0.0
        %2073 = vmatprep.subr.mxu0 0.0
        %2074 = vmatpush1.msra.mxu0 0.0
        %2075 = vmatprep.subr.mxu0 0.0
        %2076 = vmatpush1.msra.mxu0 0.0
        %2077 = vmatprep.subr.mxu0 0.0
        %2078 = vmatpush1.msra.mxu0 0.0
        %2079 = vmatprep.subr.mxu0 0.0
        %2080 = vmatpush1.msra.mxu0 0.0
        %2081 = vmatprep.subr.mxu0 0.0
        %2082 = vmatpush1.msra.mxu0 0.0
        %2083 = vmatprep.subr.mxu0 0.0
        %2084 = vmatpush1.msra.mxu0 0.0
        %2085 = vmatprep.subr.mxu0 0.0
        %2086 = vmatpush1.msra.mxu0 0.0
        %2087 = vmatprep.subr.mxu0 0.0
        %2088 = vmatpush1.msra.mxu0 0.0
        %2089 = vmatprep.subr.mxu0 0.0
        %2090 = vmatpush1.msra.mxu0 0.0
        %2091 = vmatprep.subr.mxu0 0.0
        %2092 = vmatpush1.msra.mxu0 0.0
        %2093 = vmatprep.subr.mxu0 0.0
        %2094 = vmatpush1.msra.mxu0 0.0
        %2095 = vmatprep.subr.mxu0 0.0
        %2096 = vmatpush1.msra.mxu0 0.0
        %2097 = vmatprep.subr.mxu0 0.0
        %2098 = vmatpush1.msra.mxu0 0.0
        %2099 = vmatprep.subr.mxu0 0.0
        %2100 = vmatpush1.msra.mxu0 0.0
        %2101 = vmatprep.subr.mxu0 0.0
        %2102 = vmatpush1.msra.mxu0 0.0
        %2103 = vmatprep.subr.mxu0 0.0
        %2104 = vmatpush1.msra.mxu0 0.0
        %2105 = vmatprep.mubr.f32.mxu0 0.0
        %2106 = vmatmul.mubr.f32.gmra.mrb[0].mxu0 %v2036
        %v2107 = vpop.f32.mrb[0].mxu0
        %v2108 = vadd.f32 %v2033, %v2107
        %v2109 = vpop.f32.mrb[0].mxu0
        %2110 = vmatprep.mubr.f32.mxu0 0.0
        %2111 = vmatmul.mubr.f32.gmra.mrb[0].mxu0 %v2039
        %v2112 = vpop.f32.mrb[0].mxu0
        %v2113 = vadd.f32 %v2033, %v2112
        %v2114 = vpop.f32.mrb[0].mxu0
        %2115 = vdwg.mxu0
        %2116 = vst.msk [vmem:[%s244] sm:$0xff] %vm251, %v2108
        %2117 = vst.msk [vmem:[%s244 + $0x8] sm:$0xff] %vm251, %v2113
        %s2118 = sand.u32 %s119, 1
        %s2119 = scalar_lea.sflag [#allocation4], %s2118
        %s2120 = sand.u32 %s119, 1
        %s2121 = smul.addr %s2120, 16
        %s2122 = scalar_lea.vmem [#allocation8], %s2121
        // Predicated region
        $region49: #{tpu_custom_call.1} parent=35 // pred_check
          %p2123 = pneg %p129
        $region50: #{tpu_custom_call.1} parent=35 // pred_check_branch
          %2125 = sbr.rel (%p2123) target = $region52
        $region51: #{tpu_custom_call.1} parent=35 // pred_region
          %s2127 = ssub.s32 256, 256
          %2128 = vsyncadd %s2119, %s2127
          %s2129 = smul.addr %s22, 2
          %s2130 = smul.addr %s2129, 128
          %s2131 = scalar_lea.hbm %s4, %s2130
          %s2132 = sshll.u32 %s2122, 4
          %s2133 = int_to_ptr.vmem [resolvable:$true] %s2132
          %2138 = dma.vmem_to_hbm [thread:$0]  %s2133, 256, %s2131, %s2119, 128, 128, 8
        $region52: #{tpu_custom_call.1} parent=35 // pred_fallthru
          _
      $region36: #{tpu_custom_call.1} parent=5 // pred_fallthru
        _
      %p2139 = scmp.le.s32.totalorder 2, %s17
      // Predicated region
      $region53: #{tpu_custom_call.1} parent=5 // pred_check
        %p2140 = pneg %p2139
      $region54: #{tpu_custom_call.1} parent=5 // pred_check_branch
        %2142 = sbr.rel (%p2140) target = $region56
      $region55: #{tpu_custom_call.1} parent=5 // pred_region
        %s2143 = ssub.s32 %s17, 2
        // Predicated region
        $region57: #{tpu_custom_call.1} parent=55 // pred_check
          %p2144 = pneg %p135
        $region58: #{tpu_custom_call.1} parent=55 // pred_check_branch
          %2146 = sbr.rel (%p2144) target = $region60
        $region59: #{tpu_custom_call.1} parent=55 // pred_region
          %s2147 = sand.u32 %s120, 1
          %s2148 = scalar_lea.sflag [#allocation4], %s2147
          %s2149 = sand.u32 %s120, 1
          %s2150 = smul.addr %s2149, 16
          %s2151 = scalar_lea.vmem [#allocation8], %s2150
          %2152 = dma.done %s2148, 256
        $region60: #{tpu_custom_call.1} parent=55 // pred_fallthru
          _
      $region56: #{tpu_custom_call.1} parent=5 // pred_fallthru
        _
    $region6: #{tpu_custom_call.1} parent=1 // loop_footer
      %s21 = sadd.s32 1, %s17
    $region7: #{tpu_custom_call.1} parent=1 // loop_footer_branch
      %16 = sbr.rel target = $region3
    $region8: #{tpu_custom_call.1} parent=1 // loop_exit
      _
    %2153 = vsyncpa [#allocation3], 1
    %s2154 = scalar_lea.sflag [#allocation3], 1
    %2155 = vsyncpa %s2154, 1
    %2156 = vsyncpa [#allocation6], 1
    %2157 = vsyncpa [#allocation4], 1
    %s2158 = scalar_lea.sflag [#allocation4], 1
    %2159 = vsyncpa %s2158, 1

</llo_original>
